<compile_context>
chip_gen: v5e
topology: v5e:2x2
jax: 0.10.0
libtpu: 0.0.40
codegen_flags: <defaults>
</compile_context>

<pallas_src>
import functools

import jax
import jax.numpy as jnp
from jax.experimental import pallas as pl
from jax.experimental.pallas import tpu as pltpu


def _basic_block_kernel(x_ref, w1_ref, b1_ref, w2_ref, b2_ref, m_ref, o_ref,
                        *, W, HW, Nb):
    """Fused (conv3x3+BN+ReLU) -> (conv3x3+BN+residual+ReLU) for Nb images.

    x_ref : (Nb, Cp, HW)   input block; channels on sublanes, H*W on lanes
    w1_ref: (9, Cp, Cp)    conv1 weight with BN1 scale folded, tap-major
    b1_ref: (Cp, 1)        BN1 folded bias (f32)
    w2_ref: (9, Cp, Cp)    conv2 weight with BN2 scale folded
    b2_ref: (Cp, 1)        BN2 folded bias (f32)
    m_ref : (9, 1, HW)     per-tap boundary validity (0/1), compute dtype
    o_ref : (Nb, Cp, HW)   output block
    """
    # Tap offsets in the flattened (row-major) spatial index; dy/dx in {-1,0,1}.
    offs = tuple((dy - 1) * W + (dx - 1) for dy in range(3) for dx in range(3))

    def conv3x3_bn(w_ref, a):
        # a: (Cp, HW) in compute dtype -> (Cp, HW) f32 accumulator.
        acc = None
        for t, off in enumerate(offs):
            if off == 0:                     # center tap: no shift, no mask
                tap = a
            else:
                # rolled[:, p] = a[:, (p + off) % HW]; wrapped (out-of-image)
                # lanes are zeroed by the precomputed boundary mask.
                tap = pltpu.roll(a, shift=(-off) % HW, axis=1) * m_ref[t]
            part = jnp.dot(w_ref[t], tap, preferred_element_type=jnp.float32)
            acc = part if acc is None else acc + part
        return acc

    for n in range(Nb):                      # static unroll over the batch block
        x = x_ref[n]                                               # (Cp, HW)
        # Stage 1: conv1 + bn1 (scale folded into w1) + ReLU.
        h = jnp.maximum(conv3x3_bn(w1_ref, x) + b1_ref[...], 0.0)
        # Stage 2: conv2 + bn2 + identity residual + ReLU.
        y = (conv3x3_bn(w2_ref, h.astype(x.dtype)) + b2_ref[...]
             + x.astype(jnp.float32))
        o_ref[n] = jnp.maximum(y, 0.0).astype(o_ref.dtype)


def _fold_conv_bn(w_hwio, bn_scale, cpad):
    """(3,3,Cin,Cout) HWIO weight * BN scale -> (9, cpad, cpad), [t, co, ci]."""
    cin, cout = w_hwio.shape[2], w_hwio.shape[3]
    w = w_hwio * bn_scale[None, None, None, :]       # fold gamma / sqrt(var+eps)
    w = jnp.transpose(w, (0, 1, 3, 2)).reshape(9, cout, cin)   # t = dy*3 + dx
    return jnp.pad(w, ((0, 0), (0, cpad - cout), (0, cpad - cin)))


def _pad_bias(b, cpad):
    return jnp.pad(b, (0, cpad - b.shape[0])).reshape(cpad, 1).astype(jnp.float32)


def _boundary_masks(H, W, dtype):
    """(9, 1, H*W) 0/1 tap-validity masks for a 3x3, pad=1 conv.

    Built once in the wrapper (hoisted out of the per-step kernel body)."""
    pos = jnp.arange(H * W, dtype=jnp.int32)
    row, col = pos // W, pos % W
    masks = []
    for dy in range(3):
        for dx in range(3):
            m = jnp.ones((H * W,), jnp.bool_)
            if dy == 0:
                m = m & (row >= 1)
            elif dy == 2:
                m = m & (row <= H - 2)
            if dx == 0:
                m = m & (col >= 1)
            elif dx == 2:
                m = m & (col <= W - 2)
            masks.append(m)
    return jnp.stack(masks).reshape(9, 1, H * W).astype(dtype)


def basic_block_2d_forward(x_nchw, params, *, compute_dtype=jnp.bfloat16,
                           images_per_step=8):
    """BasicBlock2D forward (stride=1, no downsample). x_nchw: (N, C, H, W)."""
    N, C, H, W = x_nchw.shape
    HW = H * W
    Cp = -(-C // 8) * 8                    # channels -> sublane-tile multiple
    Nb = max(1, min(N, images_per_step))   # images per grid step
    Ng = -(-N // Nb)                       # batch blocks (grid size)
    Np = Ng * Nb

    x = x_nchw.reshape(N, C, HW)           # spatial -> lanes, C -> sublanes
    x = jnp.pad(x, ((0, Np - N), (0, Cp - C), (0, 0))).astype(compute_dtype)

    w1 = _fold_conv_bn(params["w1"], params["bn1_scale"], Cp).astype(compute_dtype)
    w2 = _fold_conv_bn(params["w2"], params["bn2_scale"], Cp).astype(compute_dtype)
    b1 = _pad_bias(params["bn1_bias"], Cp)
    b2 = _pad_bias(params["bn2_bias"], Cp)
    masks = _boundary_masks(H, W, compute_dtype)

    out_dtype = x_nchw.dtype
    in_item = jnp.dtype(compute_dtype).itemsize
    out_item = jnp.dtype(out_dtype).itemsize
    flops = 2 * (2 * 9 * Cp * Cp * HW) * Np                      # two 3x3 convs
    bytes_accessed = (Np * Cp * HW) * (in_item + out_item) \
        + 2 * 9 * Cp * Cp * in_item + 2 * Cp * 4 + 9 * HW * in_item

    kernel = functools.partial(_basic_block_kernel, W=W, HW=HW, Nb=Nb)

    out = pl.pallas_call(
        kernel,
        out_shape=jax.ShapeDtypeStruct((Np, Cp, HW), out_dtype),
        grid_spec=pltpu.PrefetchScalarGridSpec(
            num_scalar_prefetch=0,
            grid=(Ng,),
            in_specs=[
                pl.BlockSpec((Nb, Cp, HW), lambda i: (i, 0, 0)),   # x
                pl.BlockSpec((9, Cp, Cp), lambda i: (0, 0, 0)),    # w1 (folded)
                pl.BlockSpec((Cp, 1), lambda i: (0, 0)),           # b1
                pl.BlockSpec((9, Cp, Cp), lambda i: (0, 0, 0)),    # w2 (folded)
                pl.BlockSpec((Cp, 1), lambda i: (0, 0)),           # b2
                pl.BlockSpec((9, 1, HW), lambda i: (0, 0, 0)),     # tap masks
            ],
            out_specs=pl.BlockSpec((Nb, Cp, HW), lambda i: (i, 0, 0)),
        ),
        compiler_params=pltpu.CompilerParams(
            dimension_semantics=("parallel",),
            vmem_limit_bytes=32 * 1024 * 1024),
        cost_estimate=pl.CostEstimate(
            flops=flops, transcendentals=0, bytes_accessed=bytes_accessed),
    )(x, w1, b1, w2, b2, masks)

    return out[:N, :C, :].reshape(N, C, H, W)


def make_params(key, in_channels, out_channels, eps=1e-5):
    """Deterministic synthetic parameters (conv weights HWIO, folded BN)."""
    k = jax.random.split(key, 10)
    fan1 = in_channels * 9
    fan2 = out_channels * 9
    w1 = jax.random.normal(k[0], (3, 3, in_channels, out_channels),
                           jnp.float32) * (2.0 / fan1) ** 0.5
    w2 = jax.random.normal(k[1], (3, 3, out_channels, out_channels),
                           jnp.float32) * (2.0 / fan2) ** 0.5

    def bn(kg, kb, km, kv, c):
        gamma = 1.0 + 0.1 * jax.random.normal(kg, (c,), jnp.float32)
        beta = 0.1 * jax.random.normal(kb, (c,), jnp.float32)
        mean = 0.1 * jax.random.normal(km, (c,), jnp.float32)
        var = jnp.abs(jax.random.normal(kv, (c,), jnp.float32)) + 0.5
        scale = gamma / jnp.sqrt(var + eps)
        bias = beta - mean * scale
        return scale, bias

    s1, b1 = bn(k[2], k[3], k[4], k[5], out_channels)
    s2, b2 = bn(k[6], k[7], k[8], k[9], out_channels)
    return {"w1": w1, "bn1_scale": s1, "bn1_bias": b1,
            "w2": w2, "bn2_scale": s2, "bn2_bias": b2}


def _reference(x_nchw, params):
    """Pure-JAX reference (lax.conv) for a sanity check."""
    def conv(x, w):  # x NCHW, w HWIO
        return jax.lax.conv_general_dilated(
            x, w, window_strides=(1, 1), padding=((1, 1), (1, 1)),
            dimension_numbers=("NCHW", "HWIO", "NCHW"),
            precision=jax.lax.Precision.HIGHEST)

    def bn(y, s, b):
        return y * s[None, :, None, None] + b[None, :, None, None]

    out = jax.nn.relu(bn(conv(x_nchw, params["w1"]),
                         params["bn1_scale"], params["bn1_bias"]))
    out = bn(conv(out, params["w2"]), params["bn2_scale"], params["bn2_bias"])
    return jax.nn.relu(out + x_nchw)


if __name__ == "__main__":
    N, C, H, W = 2, 4, 16, 16          # in_channels == out_channels, stride=1
    key = jax.random.PRNGKey(0)
    kx, kp = jax.random.split(key)
    x = jax.random.normal(kx, (N, C, H, W), jnp.float32)
    params = make_params(kp, C, C)

    ref = _reference(x, params)

    # f32 compute path.
    fwd_f32 = jax.jit(functools.partial(basic_block_2d_forward,
                                        compute_dtype=jnp.float32))
    out_f32 = jax.block_until_ready(fwd_f32(x, params))
    assert out_f32.shape == ref.shape == (N, C, H, W)
    assert jnp.allclose(out_f32, ref, rtol=2e-2, atol=2e-2), \
        float(jnp.max(jnp.abs(out_f32 - ref)))

    # Default bf16 compute path (recommended on v6e/v7x); f32 accumulation,
    # so only operand rounding error vs the f32 reference.
    out_bf16 = jax.block_until_ready(jax.jit(basic_block_2d_forward)(x, params))
    assert out_bf16.shape == (N, C, H, W)
    err = float(jnp.max(jnp.abs(out_bf16 - ref)))
    bound = 0.05 * float(jnp.max(jnp.abs(ref))) + 0.05
    assert err <= bound, (err, bound)

    print("KERNEL_OK")
</pallas_src>

<mosaic_0001>
module attributes {stable_mosaic.version = 11 : i64} {
  func.func @_basic_block_kernel(%arg0: i32, %arg1: memref<2x8x256xf32, #tpu.memory_space<vmem>>, %arg2: memref<9x8x8xf32, #tpu.memory_space<vmem>>, %arg3: memref<8x1xf32, #tpu.memory_space<vmem>>, %arg4: memref<9x8x8xf32, #tpu.memory_space<vmem>>, %arg5: memref<8x1xf32, #tpu.memory_space<vmem>>, %arg6: memref<9x1x256xf32, #tpu.memory_space<vmem>>, %arg7: memref<2x8x256xf32, #tpu.memory_space<vmem>>) attributes {dimension_semantics = [#tpu.dimension_semantics<parallel>], iteration_bounds = array<i64: 1>, scalar_prefetch = 0 : i64, scratch_operands = 0 : i64, tpu.core_type = #tpu.core_type<tc>, window_params = [{transform_indices = @transform_0, window_bounds = array<i64: 2, 8, 256>}, {pipeline_mode = #tpu.pipeline_mode<synchronous>, transform_indices = @transform_1, window_bounds = array<i64: 9, 8, 8>}, {pipeline_mode = #tpu.pipeline_mode<synchronous>, transform_indices = @transform_2, window_bounds = array<i64: 8, 1>}, {pipeline_mode = #tpu.pipeline_mode<synchronous>, transform_indices = @transform_3, window_bounds = array<i64: 9, 8, 8>}, {pipeline_mode = #tpu.pipeline_mode<synchronous>, transform_indices = @transform_4, window_bounds = array<i64: 8, 1>}, {pipeline_mode = #tpu.pipeline_mode<synchronous>, transform_indices = @transform_5, window_bounds = array<i64: 9, 1, 256>}, {transform_indices = @transform_6, window_bounds = array<i64: 2, 8, 256>}]} {
    %c0 = arith.constant 0 : index
    %c0_0 = arith.constant 0 : index
    %c0_1 = arith.constant 0 : index
    %0 = vector.load %arg1[%c0, %c0_0, %c0_1] : memref<2x8x256xf32, #tpu.memory_space<vmem>>, vector<1x8x256xf32>
    %1 = vector.shape_cast %0 : vector<1x8x256xf32> to vector<8x256xf32>
    %c17_i32 = arith.constant 17 : i32
    %2 = tpu.dynamic_rotate %1 by %c17_i32 dim 1 : vector<8x256xf32>, i32 -> vector<8x256xf32>
    %c0_2 = arith.constant 0 : index
    %c0_3 = arith.constant 0 : index
    %c0_4 = arith.constant 0 : index
    %3 = vector.load %arg6[%c0_2, %c0_3, %c0_4] : memref<9x1x256xf32, #tpu.memory_space<vmem>>, vector<1x1x256xf32>
    %4 = vector.shape_cast %3 : vector<1x1x256xf32> to vector<1x256xf32>
    %5 = vector.broadcast %4 : vector<1x256xf32> to vector<8x256xf32>
    %6 = arith.mulf %2, %5 : vector<8x256xf32>
    %c0_5 = arith.constant 0 : index
    %c0_6 = arith.constant 0 : index
    %c0_7 = arith.constant 0 : index
    %7 = vector.load %arg2[%c0_5, %c0_6, %c0_7] : memref<9x8x8xf32, #tpu.memory_space<vmem>>, vector<1x8x8xf32>
    %8 = vector.shape_cast %7 : vector<1x8x8xf32> to vector<8x8xf32>
    %cst = arith.constant dense<0.000000e+00> : vector<8x256xf32>
    %9 = tpu.matmul %8, %6, %cst {dimension_numbers = #tpu.dot_dimension_numbers<[1], [0], [0], [1], [0, 0, 1, 1], [], []>} : vector<8x8xf32>, vector<8x256xf32>, vector<8x256xf32> -> vector<8x256xf32>
    %c16_i32 = arith.constant 16 : i32
    %10 = tpu.dynamic_rotate %1 by %c16_i32 dim 1 : vector<8x256xf32>, i32 -> vector<8x256xf32>
    %c1 = arith.constant 1 : index
    %c0_8 = arith.constant 0 : index
    %c0_9 = arith.constant 0 : index
    %11 = vector.load %arg6[%c1, %c0_8, %c0_9] : memref<9x1x256xf32, #tpu.memory_space<vmem>>, vector<1x1x256xf32>
    %12 = vector.shape_cast %11 : vector<1x1x256xf32> to vector<1x256xf32>
    %13 = vector.broadcast %12 : vector<1x256xf32> to vector<8x256xf32>
    %14 = arith.mulf %10, %13 : vector<8x256xf32>
    %c1_10 = arith.constant 1 : index
    %c0_11 = arith.constant 0 : index
    %c0_12 = arith.constant 0 : index
    %15 = vector.load %arg2[%c1_10, %c0_11, %c0_12] : memref<9x8x8xf32, #tpu.memory_space<vmem>>, vector<1x8x8xf32>
    %16 = vector.shape_cast %15 : vector<1x8x8xf32> to vector<8x8xf32>
    %cst_13 = arith.constant dense<0.000000e+00> : vector<8x256xf32>
    %17 = tpu.matmul %16, %14, %cst_13 {dimension_numbers = #tpu.dot_dimension_numbers<[1], [0], [0], [1], [0, 0, 1, 1], [], []>} : vector<8x8xf32>, vector<8x256xf32>, vector<8x256xf32> -> vector<8x256xf32>
    %18 = arith.addf %9, %17 : vector<8x256xf32>
    %c15_i32 = arith.constant 15 : i32
    %19 = tpu.dynamic_rotate %1 by %c15_i32 dim 1 : vector<8x256xf32>, i32 -> vector<8x256xf32>
    %c2 = arith.constant 2 : index
    %c0_14 = arith.constant 0 : index
    %c0_15 = arith.constant 0 : index
    %20 = vector.load %arg6[%c2, %c0_14, %c0_15] : memref<9x1x256xf32, #tpu.memory_space<vmem>>, vector<1x1x256xf32>
    %21 = vector.shape_cast %20 : vector<1x1x256xf32> to vector<1x256xf32>
    %22 = vector.broadcast %21 : vector<1x256xf32> to vector<8x256xf32>
    %23 = arith.mulf %19, %22 : vector<8x256xf32>
    %c2_16 = arith.constant 2 : index
    %c0_17 = arith.constant 0 : index
    %c0_18 = arith.constant 0 : index
    %24 = vector.load %arg2[%c2_16, %c0_17, %c0_18] : memref<9x8x8xf32, #tpu.memory_space<vmem>>, vector<1x8x8xf32>
    %25 = vector.shape_cast %24 : vector<1x8x8xf32> to vector<8x8xf32>
    %cst_19 = arith.constant dense<0.000000e+00> : vector<8x256xf32>
    %26 = tpu.matmul %25, %23, %cst_19 {dimension_numbers = #tpu.dot_dimension_numbers<[1], [0], [0], [1], [0, 0, 1, 1], [], []>} : vector<8x8xf32>, vector<8x256xf32>, vector<8x256xf32> -> vector<8x256xf32>
    %27 = arith.addf %18, %26 : vector<8x256xf32>
    %c1_i32 = arith.constant 1 : i32
    %28 = tpu.dynamic_rotate %1 by %c1_i32 dim 1 : vector<8x256xf32>, i32 -> vector<8x256xf32>
    %c3 = arith.constant 3 : index
    %c0_20 = arith.constant 0 : index
    %c0_21 = arith.constant 0 : index
    %29 = vector.load %arg6[%c3, %c0_20, %c0_21] : memref<9x1x256xf32, #tpu.memory_space<vmem>>, vector<1x1x256xf32>
    %30 = vector.shape_cast %29 : vector<1x1x256xf32> to vector<1x256xf32>
    %31 = vector.broadcast %30 : vector<1x256xf32> to vector<8x256xf32>
    %32 = arith.mulf %28, %31 : vector<8x256xf32>
    %c3_22 = arith.constant 3 : index
    %c0_23 = arith.constant 0 : index
    %c0_24 = arith.constant 0 : index
    %33 = vector.load %arg2[%c3_22, %c0_23, %c0_24] : memref<9x8x8xf32, #tpu.memory_space<vmem>>, vector<1x8x8xf32>
    %34 = vector.shape_cast %33 : vector<1x8x8xf32> to vector<8x8xf32>
    %cst_25 = arith.constant dense<0.000000e+00> : vector<8x256xf32>
    %35 = tpu.matmul %34, %32, %cst_25 {dimension_numbers = #tpu.dot_dimension_numbers<[1], [0], [0], [1], [0, 0, 1, 1], [], []>} : vector<8x8xf32>, vector<8x256xf32>, vector<8x256xf32> -> vector<8x256xf32>
    %36 = arith.addf %27, %35 : vector<8x256xf32>
    %c4 = arith.constant 4 : index
    %c0_26 = arith.constant 0 : index
    %c0_27 = arith.constant 0 : index
    %37 = vector.load %arg2[%c4, %c0_26, %c0_27] : memref<9x8x8xf32, #tpu.memory_space<vmem>>, vector<1x8x8xf32>
    %38 = vector.shape_cast %37 : vector<1x8x8xf32> to vector<8x8xf32>
    %cst_28 = arith.constant dense<0.000000e+00> : vector<8x256xf32>
    %39 = tpu.matmul %38, %1, %cst_28 {dimension_numbers = #tpu.dot_dimension_numbers<[1], [0], [0], [1], [0, 0, 1, 1], [], []>} : vector<8x8xf32>, vector<8x256xf32>, vector<8x256xf32> -> vector<8x256xf32>
    %40 = arith.addf %36, %39 : vector<8x256xf32>
    %c255_i32 = arith.constant 255 : i32
    %41 = tpu.dynamic_rotate %1 by %c255_i32 dim 1 : vector<8x256xf32>, i32 -> vector<8x256xf32>
    %c5 = arith.constant 5 : index
    %c0_29 = arith.constant 0 : index
    %c0_30 = arith.constant 0 : index
    %42 = vector.load %arg6[%c5, %c0_29, %c0_30] : memref<9x1x256xf32, #tpu.memory_space<vmem>>, vector<1x1x256xf32>
    %43 = vector.shape_cast %42 : vector<1x1x256xf32> to vector<1x256xf32>
    %44 = vector.broadcast %43 : vector<1x256xf32> to vector<8x256xf32>
    %45 = arith.mulf %41, %44 : vector<8x256xf32>
    %c5_31 = arith.constant 5 : index
    %c0_32 = arith.constant 0 : index
    %c0_33 = arith.constant 0 : index
    %46 = vector.load %arg2[%c5_31, %c0_32, %c0_33] : memref<9x8x8xf32, #tpu.memory_space<vmem>>, vector<1x8x8xf32>
    %47 = vector.shape_cast %46 : vector<1x8x8xf32> to vector<8x8xf32>
    %cst_34 = arith.constant dense<0.000000e+00> : vector<8x256xf32>
    %48 = tpu.matmul %47, %45, %cst_34 {dimension_numbers = #tpu.dot_dimension_numbers<[1], [0], [0], [1], [0, 0, 1, 1], [], []>} : vector<8x8xf32>, vector<8x256xf32>, vector<8x256xf32> -> vector<8x256xf32>
    %49 = arith.addf %40, %48 : vector<8x256xf32>
    %c241_i32 = arith.constant 241 : i32
    %50 = tpu.dynamic_rotate %1 by %c241_i32 dim 1 : vector<8x256xf32>, i32 -> vector<8x256xf32>
    %c6 = arith.constant 6 : index
    %c0_35 = arith.constant 0 : index
    %c0_36 = arith.constant 0 : index
    %51 = vector.load %arg6[%c6, %c0_35, %c0_36] : memref<9x1x256xf32, #tpu.memory_space<vmem>>, vector<1x1x256xf32>
    %52 = vector.shape_cast %51 : vector<1x1x256xf32> to vector<1x256xf32>
    %53 = vector.broadcast %52 : vector<1x256xf32> to vector<8x256xf32>
    %54 = arith.mulf %50, %53 : vector<8x256xf32>
    %c6_37 = arith.constant 6 : index
    %c0_38 = arith.constant 0 : index
    %c0_39 = arith.constant 0 : index
    %55 = vector.load %arg2[%c6_37, %c0_38, %c0_39] : memref<9x8x8xf32, #tpu.memory_space<vmem>>, vector<1x8x8xf32>
    %56 = vector.shape_cast %55 : vector<1x8x8xf32> to vector<8x8xf32>
    %cst_40 = arith.constant dense<0.000000e+00> : vector<8x256xf32>
    %57 = tpu.matmul %56, %54, %cst_40 {dimension_numbers = #tpu.dot_dimension_numbers<[1], [0], [0], [1], [0, 0, 1, 1], [], []>} : vector<8x8xf32>, vector<8x256xf32>, vector<8x256xf32> -> vector<8x256xf32>
    %58 = arith.addf %49, %57 : vector<8x256xf32>
    %c240_i32 = arith.constant 240 : i32
    %59 = tpu.dynamic_rotate %1 by %c240_i32 dim 1 : vector<8x256xf32>, i32 -> vector<8x256xf32>
    %c7 = arith.constant 7 : index
    %c0_41 = arith.constant 0 : index
    %c0_42 = arith.constant 0 : index
    %60 = vector.load %arg6[%c7, %c0_41, %c0_42] : memref<9x1x256xf32, #tpu.memory_space<vmem>>, vector<1x1x256xf32>
    %61 = vector.shape_cast %60 : vector<1x1x256xf32> to vector<1x256xf32>
    %62 = vector.broadcast %61 : vector<1x256xf32> to vector<8x256xf32>
    %63 = arith.mulf %59, %62 : vector<8x256xf32>
    %c7_43 = arith.constant 7 : index
    %c0_44 = arith.constant 0 : index
    %c0_45 = arith.constant 0 : index
    %64 = vector.load %arg2[%c7_43, %c0_44, %c0_45] : memref<9x8x8xf32, #tpu.memory_space<vmem>>, vector<1x8x8xf32>
    %65 = vector.shape_cast %64 : vector<1x8x8xf32> to vector<8x8xf32>
    %cst_46 = arith.constant dense<0.000000e+00> : vector<8x256xf32>
    %66 = tpu.matmul %65, %63, %cst_46 {dimension_numbers = #tpu.dot_dimension_numbers<[1], [0], [0], [1], [0, 0, 1, 1], [], []>} : vector<8x8xf32>, vector<8x256xf32>, vector<8x256xf32> -> vector<8x256xf32>
    %67 = arith.addf %58, %66 : vector<8x256xf32>
    %c239_i32 = arith.constant 239 : i32
    %68 = tpu.dynamic_rotate %1 by %c239_i32 dim 1 : vector<8x256xf32>, i32 -> vector<8x256xf32>
    %c8 = arith.constant 8 : index
    %c0_47 = arith.constant 0 : index
    %c0_48 = arith.constant 0 : index
    %69 = vector.load %arg6[%c8, %c0_47, %c0_48] : memref<9x1x256xf32, #tpu.memory_space<vmem>>, vector<1x1x256xf32>
    %70 = vector.shape_cast %69 : vector<1x1x256xf32> to vector<1x256xf32>
    %71 = vector.broadcast %70 : vector<1x256xf32> to vector<8x256xf32>
    %72 = arith.mulf %68, %71 : vector<8x256xf32>
    %c8_49 = arith.constant 8 : index
    %c0_50 = arith.constant 0 : index
    %c0_51 = arith.constant 0 : index
    %73 = vector.load %arg2[%c8_49, %c0_50, %c0_51] : memref<9x8x8xf32, #tpu.memory_space<vmem>>, vector<1x8x8xf32>
    %74 = vector.shape_cast %73 : vector<1x8x8xf32> to vector<8x8xf32>
    %cst_52 = arith.constant dense<0.000000e+00> : vector<8x256xf32>
    %75 = tpu.matmul %74, %72, %cst_52 {dimension_numbers = #tpu.dot_dimension_numbers<[1], [0], [0], [1], [0, 0, 1, 1], [], []>} : vector<8x8xf32>, vector<8x256xf32>, vector<8x256xf32> -> vector<8x256xf32>
    %76 = arith.addf %67, %75 : vector<8x256xf32>
    %c0_53 = arith.constant 0 : index
    %c0_54 = arith.constant 0 : index
    %77 = vector.load %arg3[%c0_53, %c0_54] : memref<8x1xf32, #tpu.memory_space<vmem>>, vector<8x1xf32>
    %78 = vector.broadcast %77 : vector<8x1xf32> to vector<8x256xf32>
    %79 = arith.addf %76, %78 : vector<8x256xf32>
    %cst_55 = arith.constant 0.000000e+00 : f32
    %80 = vector.broadcast %cst_55 : f32 to vector<8x256xf32>
    %81 = arith.maximumf %79, %80 : vector<8x256xf32>
    %c17_i32_56 = arith.constant 17 : i32
    %82 = tpu.dynamic_rotate %81 by %c17_i32_56 dim 1 : vector<8x256xf32>, i32 -> vector<8x256xf32>
    %c0_57 = arith.constant 0 : index
    %c0_58 = arith.constant 0 : index
    %c0_59 = arith.constant 0 : index
    %83 = vector.load %arg6[%c0_57, %c0_58, %c0_59] : memref<9x1x256xf32, #tpu.memory_space<vmem>>, vector<1x1x256xf32>
    %84 = vector.shape_cast %83 : vector<1x1x256xf32> to vector<1x256xf32>
    %85 = vector.broadcast %84 : vector<1x256xf32> to vector<8x256xf32>
    %86 = arith.mulf %82, %85 : vector<8x256xf32>
    %c0_60 = arith.constant 0 : index
    %c0_61 = arith.constant 0 : index
    %c0_62 = arith.constant 0 : index
    %87 = vector.load %arg4[%c0_60, %c0_61, %c0_62] : memref<9x8x8xf32, #tpu.memory_space<vmem>>, vector<1x8x8xf32>
    %88 = vector.shape_cast %87 : vector<1x8x8xf32> to vector<8x8xf32>
    %cst_63 = arith.constant dense<0.000000e+00> : vector<8x256xf32>
    %89 = tpu.matmul %88, %86, %cst_63 {dimension_numbers = #tpu.dot_dimension_numbers<[1], [0], [0], [1], [0, 0, 1, 1], [], []>} : vector<8x8xf32>, vector<8x256xf32>, vector<8x256xf32> -> vector<8x256xf32>
    %c16_i32_64 = arith.constant 16 : i32
    %90 = tpu.dynamic_rotate %81 by %c16_i32_64 dim 1 : vector<8x256xf32>, i32 -> vector<8x256xf32>
    %c1_65 = arith.constant 1 : index
    %c0_66 = arith.constant 0 : index
    %c0_67 = arith.constant 0 : index
    %91 = vector.load %arg6[%c1_65, %c0_66, %c0_67] : memref<9x1x256xf32, #tpu.memory_space<vmem>>, vector<1x1x256xf32>
    %92 = vector.shape_cast %91 : vector<1x1x256xf32> to vector<1x256xf32>
    %93 = vector.broadcast %92 : vector<1x256xf32> to vector<8x256xf32>
    %94 = arith.mulf %90, %93 : vector<8x256xf32>
    %c1_68 = arith.constant 1 : index
    %c0_69 = arith.constant 0 : index
    %c0_70 = arith.constant 0 : index
    %95 = vector.load %arg4[%c1_68, %c0_69, %c0_70] : memref<9x8x8xf32, #tpu.memory_space<vmem>>, vector<1x8x8xf32>
    %96 = vector.shape_cast %95 : vector<1x8x8xf32> to vector<8x8xf32>
    %cst_71 = arith.constant dense<0.000000e+00> : vector<8x256xf32>
    %97 = tpu.matmul %96, %94, %cst_71 {dimension_numbers = #tpu.dot_dimension_numbers<[1], [0], [0], [1], [0, 0, 1, 1], [], []>} : vector<8x8xf32>, vector<8x256xf32>, vector<8x256xf32> -> vector<8x256xf32>
    %98 = arith.addf %89, %97 : vector<8x256xf32>
    %c15_i32_72 = arith.constant 15 : i32
    %99 = tpu.dynamic_rotate %81 by %c15_i32_72 dim 1 : vector<8x256xf32>, i32 -> vector<8x256xf32>
    %c2_73 = arith.constant 2 : index
    %c0_74 = arith.constant 0 : index
    %c0_75 = arith.constant 0 : index
    %100 = vector.load %arg6[%c2_73, %c0_74, %c0_75] : memref<9x1x256xf32, #tpu.memory_space<vmem>>, vector<1x1x256xf32>
    %101 = vector.shape_cast %100 : vector<1x1x256xf32> to vector<1x256xf32>
    %102 = vector.broadcast %101 : vector<1x256xf32> to vector<8x256xf32>
    %103 = arith.mulf %99, %102 : vector<8x256xf32>
    %c2_76 = arith.constant 2 : index
    %c0_77 = arith.constant 0 : index
    %c0_78 = arith.constant 0 : index
    %104 = vector.load %arg4[%c2_76, %c0_77, %c0_78] : memref<9x8x8xf32, #tpu.memory_space<vmem>>, vector<1x8x8xf32>
    %105 = vector.shape_cast %104 : vector<1x8x8xf32> to vector<8x8xf32>
    %cst_79 = arith.constant dense<0.000000e+00> : vector<8x256xf32>
    %106 = tpu.matmul %105, %103, %cst_79 {dimension_numbers = #tpu.dot_dimension_numbers<[1], [0], [0], [1], [0, 0, 1, 1], [], []>} : vector<8x8xf32>, vector<8x256xf32>, vector<8x256xf32> -> vector<8x256xf32>
    %107 = arith.addf %98, %106 : vector<8x256xf32>
    %c1_i32_80 = arith.constant 1 : i32
    %108 = tpu.dynamic_rotate %81 by %c1_i32_80 dim 1 : vector<8x256xf32>, i32 -> vector<8x256xf32>
    %c3_81 = arith.constant 3 : index
    %c0_82 = arith.constant 0 : index
    %c0_83 = arith.constant 0 : index
    %109 = vector.load %arg6[%c3_81, %c0_82, %c0_83] : memref<9x1x256xf32, #tpu.memory_space<vmem>>, vector<1x1x256xf32>
    %110 = vector.shape_cast %109 : vector<1x1x256xf32> to vector<1x256xf32>
    %111 = vector.broadcast %110 : vector<1x256xf32> to vector<8x256xf32>
    %112 = arith.mulf %108, %111 : vector<8x256xf32>
    %c3_84 = arith.constant 3 : index
    %c0_85 = arith.constant 0 : index
    %c0_86 = arith.constant 0 : index
    %113 = vector.load %arg4[%c3_84, %c0_85, %c0_86] : memref<9x8x8xf32, #tpu.memory_space<vmem>>, vector<1x8x8xf32>
    %114 = vector.shape_cast %113 : vector<1x8x8xf32> to vector<8x8xf32>
    %cst_87 = arith.constant dense<0.000000e+00> : vector<8x256xf32>
    %115 = tpu.matmul %114, %112, %cst_87 {dimension_numbers = #tpu.dot_dimension_numbers<[1], [0], [0], [1], [0, 0, 1, 1], [], []>} : vector<8x8xf32>, vector<8x256xf32>, vector<8x256xf32> -> vector<8x256xf32>
    %116 = arith.addf %107, %115 : vector<8x256xf32>
    %c4_88 = arith.constant 4 : index
    %c0_89 = arith.constant 0 : index
    %c0_90 = arith.constant 0 : index
    %117 = vector.load %arg4[%c4_88, %c0_89, %c0_90] : memref<9x8x8xf32, #tpu.memory_space<vmem>>, vector<1x8x8xf32>
    %118 = vector.shape_cast %117 : vector<1x8x8xf32> to vector<8x8xf32>
    %cst_91 = arith.constant dense<0.000000e+00> : vector<8x256xf32>
    %119 = tpu.matmul %118, %81, %cst_91 {dimension_numbers = #tpu.dot_dimension_numbers<[1], [0], [0], [1], [0, 0, 1, 1], [], []>} : vector<8x8xf32>, vector<8x256xf32>, vector<8x256xf32> -> vector<8x256xf32>
    %120 = arith.addf %116, %119 : vector<8x256xf32>
    %c255_i32_92 = arith.constant 255 : i32
    %121 = tpu.dynamic_rotate %81 by %c255_i32_92 dim 1 : vector<8x256xf32>, i32 -> vector<8x256xf32>
    %c5_93 = arith.constant 5 : index
    %c0_94 = arith.constant 0 : index
    %c0_95 = arith.constant 0 : index
    %122 = vector.load %arg6[%c5_93, %c0_94, %c0_95] : memref<9x1x256xf32, #tpu.memory_space<vmem>>, vector<1x1x256xf32>
    %123 = vector.shape_cast %122 : vector<1x1x256xf32> to vector<1x256xf32>
    %124 = vector.broadcast %123 : vector<1x256xf32> to vector<8x256xf32>
    %125 = arith.mulf %121, %124 : vector<8x256xf32>
    %c5_96 = arith.constant 5 : index
    %c0_97 = arith.constant 0 : index
    %c0_98 = arith.constant 0 : index
    %126 = vector.load %arg4[%c5_96, %c0_97, %c0_98] : memref<9x8x8xf32, #tpu.memory_space<vmem>>, vector<1x8x8xf32>
    %127 = vector.shape_cast %126 : vector<1x8x8xf32> to vector<8x8xf32>
    %cst_99 = arith.constant dense<0.000000e+00> : vector<8x256xf32>
    %128 = tpu.matmul %127, %125, %cst_99 {dimension_numbers = #tpu.dot_dimension_numbers<[1], [0], [0], [1], [0, 0, 1, 1], [], []>} : vector<8x8xf32>, vector<8x256xf32>, vector<8x256xf32> -> vector<8x256xf32>
    %129 = arith.addf %120, %128 : vector<8x256xf32>
    %c241_i32_100 = arith.constant 241 : i32
    %130 = tpu.dynamic_rotate %81 by %c241_i32_100 dim 1 : vector<8x256xf32>, i32 -> vector<8x256xf32>
    %c6_101 = arith.constant 6 : index
    %c0_102 = arith.constant 0 : index
    %c0_103 = arith.constant 0 : index
    %131 = vector.load %arg6[%c6_101, %c0_102, %c0_103] : memref<9x1x256xf32, #tpu.memory_space<vmem>>, vector<1x1x256xf32>
    %132 = vector.shape_cast %131 : vector<1x1x256xf32> to vector<1x256xf32>
    %133 = vector.broadcast %132 : vector<1x256xf32> to vector<8x256xf32>
    %134 = arith.mulf %130, %133 : vector<8x256xf32>
    %c6_104 = arith.constant 6 : index
    %c0_105 = arith.constant 0 : index
    %c0_106 = arith.constant 0 : index
    %135 = vector.load %arg4[%c6_104, %c0_105, %c0_106] : memref<9x8x8xf32, #tpu.memory_space<vmem>>, vector<1x8x8xf32>
    %136 = vector.shape_cast %135 : vector<1x8x8xf32> to vector<8x8xf32>
    %cst_107 = arith.constant dense<0.000000e+00> : vector<8x256xf32>
    %137 = tpu.matmul %136, %134, %cst_107 {dimension_numbers = #tpu.dot_dimension_numbers<[1], [0], [0], [1], [0, 0, 1, 1], [], []>} : vector<8x8xf32>, vector<8x256xf32>, vector<8x256xf32> -> vector<8x256xf32>
    %138 = arith.addf %129, %137 : vector<8x256xf32>
    %c240_i32_108 = arith.constant 240 : i32
    %139 = tpu.dynamic_rotate %81 by %c240_i32_108 dim 1 : vector<8x256xf32>, i32 -> vector<8x256xf32>
    %c7_109 = arith.constant 7 : index
    %c0_110 = arith.constant 0 : index
    %c0_111 = arith.constant 0 : index
    %140 = vector.load %arg6[%c7_109, %c0_110, %c0_111] : memref<9x1x256xf32, #tpu.memory_space<vmem>>, vector<1x1x256xf32>
    %141 = vector.shape_cast %140 : vector<1x1x256xf32> to vector<1x256xf32>
    %142 = vector.broadcast %141 : vector<1x256xf32> to vector<8x256xf32>
    %143 = arith.mulf %139, %142 : vector<8x256xf32>
    %c7_112 = arith.constant 7 : index
    %c0_113 = arith.constant 0 : index
    %c0_114 = arith.constant 0 : index
    %144 = vector.load %arg4[%c7_112, %c0_113, %c0_114] : memref<9x8x8xf32, #tpu.memory_space<vmem>>, vector<1x8x8xf32>
    %145 = vector.shape_cast %144 : vector<1x8x8xf32> to vector<8x8xf32>
    %cst_115 = arith.constant dense<0.000000e+00> : vector<8x256xf32>
    %146 = tpu.matmul %145, %143, %cst_115 {dimension_numbers = #tpu.dot_dimension_numbers<[1], [0], [0], [1], [0, 0, 1, 1], [], []>} : vector<8x8xf32>, vector<8x256xf32>, vector<8x256xf32> -> vector<8x256xf32>
    %147 = arith.addf %138, %146 : vector<8x256xf32>
    %c239_i32_116 = arith.constant 239 : i32
    %148 = tpu.dynamic_rotate %81 by %c239_i32_116 dim 1 : vector<8x256xf32>, i32 -> vector<8x256xf32>
    %c8_117 = arith.constant 8 : index
    %c0_118 = arith.constant 0 : index
    %c0_119 = arith.constant 0 : index
    %149 = vector.load %arg6[%c8_117, %c0_118, %c0_119] : memref<9x1x256xf32, #tpu.memory_space<vmem>>, vector<1x1x256xf32>
    %150 = vector.shape_cast %149 : vector<1x1x256xf32> to vector<1x256xf32>
    %151 = vector.broadcast %150 : vector<1x256xf32> to vector<8x256xf32>
    %152 = arith.mulf %148, %151 : vector<8x256xf32>
    %c8_120 = arith.constant 8 : index
    %c0_121 = arith.constant 0 : index
    %c0_122 = arith.constant 0 : index
    %153 = vector.load %arg4[%c8_120, %c0_121, %c0_122] : memref<9x8x8xf32, #tpu.memory_space<vmem>>, vector<1x8x8xf32>
    %154 = vector.shape_cast %153 : vector<1x8x8xf32> to vector<8x8xf32>
    %cst_123 = arith.constant dense<0.000000e+00> : vector<8x256xf32>
    %155 = tpu.matmul %154, %152, %cst_123 {dimension_numbers = #tpu.dot_dimension_numbers<[1], [0], [0], [1], [0, 0, 1, 1], [], []>} : vector<8x8xf32>, vector<8x256xf32>, vector<8x256xf32> -> vector<8x256xf32>
    %156 = arith.addf %147, %155 : vector<8x256xf32>
    %c0_124 = arith.constant 0 : index
    %c0_125 = arith.constant 0 : index
    %157 = vector.load %arg5[%c0_124, %c0_125] : memref<8x1xf32, #tpu.memory_space<vmem>>, vector<8x1xf32>
    %158 = vector.broadcast %157 : vector<8x1xf32> to vector<8x256xf32>
    %159 = arith.addf %156, %158 : vector<8x256xf32>
    %160 = arith.addf %159, %1 : vector<8x256xf32>
    %cst_126 = arith.constant 0.000000e+00 : f32
    %161 = vector.broadcast %cst_126 : f32 to vector<8x256xf32>
    %162 = arith.maximumf %160, %161 : vector<8x256xf32>
    %c0_127 = arith.constant 0 : index
    %c0_128 = arith.constant 0 : index
    %c0_129 = arith.constant 0 : index
    %163 = vector.load %arg7[%c0_127, %c0_128, %c0_129] : memref<2x8x256xf32, #tpu.memory_space<vmem>>, vector<1x8x256xf32>
    %164 = vector.shape_cast %163 : vector<1x8x256xf32> to vector<8x256xf32>
    %165 = vector.shape_cast %162 : vector<8x256xf32> to vector<1x8x256xf32>
    tpu.vector_store %arg7[%c0_127, %c0_128, %c0_129], %165 {strides = array<i32>} : memref<2x8x256xf32, #tpu.memory_space<vmem>>, vector<1x8x256xf32>,
    %c1_130 = arith.constant 1 : index
    %c0_131 = arith.constant 0 : index
    %c0_132 = arith.constant 0 : index
    %166 = vector.load %arg1[%c1_130, %c0_131, %c0_132] : memref<2x8x256xf32, #tpu.memory_space<vmem>>, vector<1x8x256xf32>
    %167 = vector.shape_cast %166 : vector<1x8x256xf32> to vector<8x256xf32>
    %c17_i32_133 = arith.constant 17 : i32
    %168 = tpu.dynamic_rotate %167 by %c17_i32_133 dim 1 : vector<8x256xf32>, i32 -> vector<8x256xf32>
    %c0_134 = arith.constant 0 : index
    %c0_135 = arith.constant 0 : index
    %c0_136 = arith.constant 0 : index
    %169 = vector.load %arg6[%c0_134, %c0_135, %c0_136] : memref<9x1x256xf32, #tpu.memory_space<vmem>>, vector<1x1x256xf32>
    %170 = vector.shape_cast %169 : vector<1x1x256xf32> to vector<1x256xf32>
    %171 = vector.broadcast %170 : vector<1x256xf32> to vector<8x256xf32>
    %172 = arith.mulf %168, %171 : vector<8x256xf32>
    %c0_137 = arith.constant 0 : index
    %c0_138 = arith.constant 0 : index
    %c0_139 = arith.constant 0 : index
    %173 = vector.load %arg2[%c0_137, %c0_138, %c0_139] : memref<9x8x8xf32, #tpu.memory_space<vmem>>, vector<1x8x8xf32>
    %174 = vector.shape_cast %173 : vector<1x8x8xf32> to vector<8x8xf32>
    %cst_140 = arith.constant dense<0.000000e+00> : vector<8x256xf32>
    %175 = tpu.matmul %174, %172, %cst_140 {dimension_numbers = #tpu.dot_dimension_numbers<[1], [0], [0], [1], [0, 0, 1, 1], [], []>} : vector<8x8xf32>, vector<8x256xf32>, vector<8x256xf32> -> vector<8x256xf32>
    %c16_i32_141 = arith.constant 16 : i32
    %176 = tpu.dynamic_rotate %167 by %c16_i32_141 dim 1 : vector<8x256xf32>, i32 -> vector<8x256xf32>
    %c1_142 = arith.constant 1 : index
    %c0_143 = arith.constant 0 : index
    %c0_144 = arith.constant 0 : index
    %177 = vector.load %arg6[%c1_142, %c0_143, %c0_144] : memref<9x1x256xf32, #tpu.memory_space<vmem>>, vector<1x1x256xf32>
    %178 = vector.shape_cast %177 : vector<1x1x256xf32> to vector<1x256xf32>
    %179 = vector.broadcast %178 : vector<1x256xf32> to vector<8x256xf32>
    %180 = arith.mulf %176, %179 : vector<8x256xf32>
    %c1_145 = arith.constant 1 : index
    %c0_146 = arith.constant 0 : index
    %c0_147 = arith.constant 0 : index
    %181 = vector.load %arg2[%c1_145, %c0_146, %c0_147] : memref<9x8x8xf32, #tpu.memory_space<vmem>>, vector<1x8x8xf32>
    %182 = vector.shape_cast %181 : vector<1x8x8xf32> to vector<8x8xf32>
    %cst_148 = arith.constant dense<0.000000e+00> : vector<8x256xf32>
    %183 = tpu.matmul %182, %180, %cst_148 {dimension_numbers = #tpu.dot_dimension_numbers<[1], [0], [0], [1], [0, 0, 1, 1], [], []>} : vector<8x8xf32>, vector<8x256xf32>, vector<8x256xf32> -> vector<8x256xf32>
    %184 = arith.addf %175, %183 : vector<8x256xf32>
    %c15_i32_149 = arith.constant 15 : i32
    %185 = tpu.dynamic_rotate %167 by %c15_i32_149 dim 1 : vector<8x256xf32>, i32 -> vector<8x256xf32>
    %c2_150 = arith.constant 2 : index
    %c0_151 = arith.constant 0 : index
    %c0_152 = arith.constant 0 : index
    %186 = vector.load %arg6[%c2_150, %c0_151, %c0_152] : memref<9x1x256xf32, #tpu.memory_space<vmem>>, vector<1x1x256xf32>
    %187 = vector.shape_cast %186 : vector<1x1x256xf32> to vector<1x256xf32>
    %188 = vector.broadcast %187 : vector<1x256xf32> to vector<8x256xf32>
    %189 = arith.mulf %185, %188 : vector<8x256xf32>
    %c2_153 = arith.constant 2 : index
    %c0_154 = arith.constant 0 : index
    %c0_155 = arith.constant 0 : index
    %190 = vector.load %arg2[%c2_153, %c0_154, %c0_155] : memref<9x8x8xf32, #tpu.memory_space<vmem>>, vector<1x8x8xf32>
    %191 = vector.shape_cast %190 : vector<1x8x8xf32> to vector<8x8xf32>
    %cst_156 = arith.constant dense<0.000000e+00> : vector<8x256xf32>
    %192 = tpu.matmul %191, %189, %cst_156 {dimension_numbers = #tpu.dot_dimension_numbers<[1], [0], [0], [1], [0, 0, 1, 1], [], []>} : vector<8x8xf32>, vector<8x256xf32>, vector<8x256xf32> -> vector<8x256xf32>
    %193 = arith.addf %184, %192 : vector<8x256xf32>
    %c1_i32_157 = arith.constant 1 : i32
    %194 = tpu.dynamic_rotate %167 by %c1_i32_157 dim 1 : vector<8x256xf32>, i32 -> vector<8x256xf32>
    %c3_158 = arith.constant 3 : index
    %c0_159 = arith.constant 0 : index
    %c0_160 = arith.constant 0 : index
    %195 = vector.load %arg6[%c3_158, %c0_159, %c0_160] : memref<9x1x256xf32, #tpu.memory_space<vmem>>, vector<1x1x256xf32>
    %196 = vector.shape_cast %195 : vector<1x1x256xf32> to vector<1x256xf32>
    %197 = vector.broadcast %196 : vector<1x256xf32> to vector<8x256xf32>
    %198 = arith.mulf %194, %197 : vector<8x256xf32>
    %c3_161 = arith.constant 3 : index
    %c0_162 = arith.constant 0 : index
    %c0_163 = arith.constant 0 : index
    %199 = vector.load %arg2[%c3_161, %c0_162, %c0_163] : memref<9x8x8xf32, #tpu.memory_space<vmem>>, vector<1x8x8xf32>
    %200 = vector.shape_cast %199 : vector<1x8x8xf32> to vector<8x8xf32>
    %cst_164 = arith.constant dense<0.000000e+00> : vector<8x256xf32>
    %201 = tpu.matmul %200, %198, %cst_164 {dimension_numbers = #tpu.dot_dimension_numbers<[1], [0], [0], [1], [0, 0, 1, 1], [], []>} : vector<8x8xf32>, vector<8x256xf32>, vector<8x256xf32> -> vector<8x256xf32>
    %202 = arith.addf %193, %201 : vector<8x256xf32>
    %c4_165 = arith.constant 4 : index
    %c0_166 = arith.constant 0 : index
    %c0_167 = arith.constant 0 : index
    %203 = vector.load %arg2[%c4_165, %c0_166, %c0_167] : memref<9x8x8xf32, #tpu.memory_space<vmem>>, vector<1x8x8xf32>
    %204 = vector.shape_cast %203 : vector<1x8x8xf32> to vector<8x8xf32>
    %cst_168 = arith.constant dense<0.000000e+00> : vector<8x256xf32>
    %205 = tpu.matmul %204, %167, %cst_168 {dimension_numbers = #tpu.dot_dimension_numbers<[1], [0], [0], [1], [0, 0, 1, 1], [], []>} : vector<8x8xf32>, vector<8x256xf32>, vector<8x256xf32> -> vector<8x256xf32>
    %206 = arith.addf %202, %205 : vector<8x256xf32>
    %c255_i32_169 = arith.constant 255 : i32
    %207 = tpu.dynamic_rotate %167 by %c255_i32_169 dim 1 : vector<8x256xf32>, i32 -> vector<8x256xf32>
    %c5_170 = arith.constant 5 : index
    %c0_171 = arith.constant 0 : index
    %c0_172 = arith.constant 0 : index
    %208 = vector.load %arg6[%c5_170, %c0_171, %c0_172] : memref<9x1x256xf32, #tpu.memory_space<vmem>>, vector<1x1x256xf32>
    %209 = vector.shape_cast %208 : vector<1x1x256xf32> to vector<1x256xf32>
    %210 = vector.broadcast %209 : vector<1x256xf32> to vector<8x256xf32>
    %211 = arith.mulf %207, %210 : vector<8x256xf32>
    %c5_173 = arith.constant 5 : index
    %c0_174 = arith.constant 0 : index
    %c0_175 = arith.constant 0 : index
    %212 = vector.load %arg2[%c5_173, %c0_174, %c0_175] : memref<9x8x8xf32, #tpu.memory_space<vmem>>, vector<1x8x8xf32>
    %213 = vector.shape_cast %212 : vector<1x8x8xf32> to vector<8x8xf32>
    %cst_176 = arith.constant dense<0.000000e+00> : vector<8x256xf32>
    %214 = tpu.matmul %213, %211, %cst_176 {dimension_numbers = #tpu.dot_dimension_numbers<[1], [0], [0], [1], [0, 0, 1, 1], [], []>} : vector<8x8xf32>, vector<8x256xf32>, vector<8x256xf32> -> vector<8x256xf32>
    %215 = arith.addf %206, %214 : vector<8x256xf32>
    %c241_i32_177 = arith.constant 241 : i32
    %216 = tpu.dynamic_rotate %167 by %c241_i32_177 dim 1 : vector<8x256xf32>, i32 -> vector<8x256xf32>
    %c6_178 = arith.constant 6 : index
    %c0_179 = arith.constant 0 : index
    %c0_180 = arith.constant 0 : index
    %217 = vector.load %arg6[%c6_178, %c0_179, %c0_180] : memref<9x1x256xf32, #tpu.memory_space<vmem>>, vector<1x1x256xf32>
    %218 = vector.shape_cast %217 : vector<1x1x256xf32> to vector<1x256xf32>
    %219 = vector.broadcast %218 : vector<1x256xf32> to vector<8x256xf32>
    %220 = arith.mulf %216, %219 : vector<8x256xf32>
    %c6_181 = arith.constant 6 : index
    %c0_182 = arith.constant 0 : index
    %c0_183 = arith.constant 0 : index
    %221 = vector.load %arg2[%c6_181, %c0_182, %c0_183] : memref<9x8x8xf32, #tpu.memory_space<vmem>>, vector<1x8x8xf32>
    %222 = vector.shape_cast %221 : vector<1x8x8xf32> to vector<8x8xf32>
    %cst_184 = arith.constant dense<0.000000e+00> : vector<8x256xf32>
    %223 = tpu.matmul %222, %220, %cst_184 {dimension_numbers = #tpu.dot_dimension_numbers<[1], [0], [0], [1], [0, 0, 1, 1], [], []>} : vector<8x8xf32>, vector<8x256xf32>, vector<8x256xf32> -> vector<8x256xf32>
    %224 = arith.addf %215, %223 : vector<8x256xf32>
    %c240_i32_185 = arith.constant 240 : i32
    %225 = tpu.dynamic_rotate %167 by %c240_i32_185 dim 1 : vector<8x256xf32>, i32 -> vector<8x256xf32>
    %c7_186 = arith.constant 7 : index
    %c0_187 = arith.constant 0 : index
    %c0_188 = arith.constant 0 : index
    %226 = vector.load %arg6[%c7_186, %c0_187, %c0_188] : memref<9x1x256xf32, #tpu.memory_space<vmem>>, vector<1x1x256xf32>
    %227 = vector.shape_cast %226 : vector<1x1x256xf32> to vector<1x256xf32>
    %228 = vector.broadcast %227 : vector<1x256xf32> to vector<8x256xf32>
    %229 = arith.mulf %225, %228 : vector<8x256xf32>
    %c7_189 = arith.constant 7 : index
    %c0_190 = arith.constant 0 : index
    %c0_191 = arith.constant 0 : index
    %230 = vector.load %arg2[%c7_189, %c0_190, %c0_191] : memref<9x8x8xf32, #tpu.memory_space<vmem>>, vector<1x8x8xf32>
    %231 = vector.shape_cast %230 : vector<1x8x8xf32> to vector<8x8xf32>
    %cst_192 = arith.constant dense<0.000000e+00> : vector<8x256xf32>
    %232 = tpu.matmul %231, %229, %cst_192 {dimension_numbers = #tpu.dot_dimension_numbers<[1], [0], [0], [1], [0, 0, 1, 1], [], []>} : vector<8x8xf32>, vector<8x256xf32>, vector<8x256xf32> -> vector<8x256xf32>
    %233 = arith.addf %224, %232 : vector<8x256xf32>
    %c239_i32_193 = arith.constant 239 : i32
    %234 = tpu.dynamic_rotate %167 by %c239_i32_193 dim 1 : vector<8x256xf32>, i32 -> vector<8x256xf32>
    %c8_194 = arith.constant 8 : index
    %c0_195 = arith.constant 0 : index
    %c0_196 = arith.constant 0 : index
    %235 = vector.load %arg6[%c8_194, %c0_195, %c0_196] : memref<9x1x256xf32, #tpu.memory_space<vmem>>, vector<1x1x256xf32>
    %236 = vector.shape_cast %235 : vector<1x1x256xf32> to vector<1x256xf32>
    %237 = vector.broadcast %236 : vector<1x256xf32> to vector<8x256xf32>
    %238 = arith.mulf %234, %237 : vector<8x256xf32>
    %c8_197 = arith.constant 8 : index
    %c0_198 = arith.constant 0 : index
    %c0_199 = arith.constant 0 : index
    %239 = vector.load %arg2[%c8_197, %c0_198, %c0_199] : memref<9x8x8xf32, #tpu.memory_space<vmem>>, vector<1x8x8xf32>
    %240 = vector.shape_cast %239 : vector<1x8x8xf32> to vector<8x8xf32>
    %cst_200 = arith.constant dense<0.000000e+00> : vector<8x256xf32>
    %241 = tpu.matmul %240, %238, %cst_200 {dimension_numbers = #tpu.dot_dimension_numbers<[1], [0], [0], [1], [0, 0, 1, 1], [], []>} : vector<8x8xf32>, vector<8x256xf32>, vector<8x256xf32> -> vector<8x256xf32>
    %242 = arith.addf %233, %241 : vector<8x256xf32>
    %c0_201 = arith.constant 0 : index
    %c0_202 = arith.constant 0 : index
    %243 = vector.load %arg3[%c0_201, %c0_202] : memref<8x1xf32, #tpu.memory_space<vmem>>, vector<8x1xf32>
    %244 = vector.broadcast %243 : vector<8x1xf32> to vector<8x256xf32>
    %245 = arith.addf %242, %244 : vector<8x256xf32>
    %cst_203 = arith.constant 0.000000e+00 : f32
    %246 = vector.broadcast %cst_203 : f32 to vector<8x256xf32>
    %247 = arith.maximumf %245, %246 : vector<8x256xf32>
    %c17_i32_204 = arith.constant 17 : i32
    %248 = tpu.dynamic_rotate %247 by %c17_i32_204 dim 1 : vector<8x256xf32>, i32 -> vector<8x256xf32>
    %c0_205 = arith.constant 0 : index
    %c0_206 = arith.constant 0 : index
    %c0_207 = arith.constant 0 : index
    %249 = vector.load %arg6[%c0_205, %c0_206, %c0_207] : memref<9x1x256xf32, #tpu.memory_space<vmem>>, vector<1x1x256xf32>
    %250 = vector.shape_cast %249 : vector<1x1x256xf32> to vector<1x256xf32>
    %251 = vector.broadcast %250 : vector<1x256xf32> to vector<8x256xf32>
    %252 = arith.mulf %248, %251 : vector<8x256xf32>
    %c0_208 = arith.constant 0 : index
    %c0_209 = arith.constant 0 : index
    %c0_210 = arith.constant 0 : index
    %253 = vector.load %arg4[%c0_208, %c0_209, %c0_210] : memref<9x8x8xf32, #tpu.memory_space<vmem>>, vector<1x8x8xf32>
    %254 = vector.shape_cast %253 : vector<1x8x8xf32> to vector<8x8xf32>
    %cst_211 = arith.constant dense<0.000000e+00> : vector<8x256xf32>
    %255 = tpu.matmul %254, %252, %cst_211 {dimension_numbers = #tpu.dot_dimension_numbers<[1], [0], [0], [1], [0, 0, 1, 1], [], []>} : vector<8x8xf32>, vector<8x256xf32>, vector<8x256xf32> -> vector<8x256xf32>
    %c16_i32_212 = arith.constant 16 : i32
    %256 = tpu.dynamic_rotate %247 by %c16_i32_212 dim 1 : vector<8x256xf32>, i32 -> vector<8x256xf32>
    %c1_213 = arith.constant 1 : index
    %c0_214 = arith.constant 0 : index
    %c0_215 = arith.constant 0 : index
    %257 = vector.load %arg6[%c1_213, %c0_214, %c0_215] : memref<9x1x256xf32, #tpu.memory_space<vmem>>, vector<1x1x256xf32>
    %258 = vector.shape_cast %257 : vector<1x1x256xf32> to vector<1x256xf32>
    %259 = vector.broadcast %258 : vector<1x256xf32> to vector<8x256xf32>
    %260 = arith.mulf %256, %259 : vector<8x256xf32>
    %c1_216 = arith.constant 1 : index
    %c0_217 = arith.constant 0 : index
    %c0_218 = arith.constant 0 : index
    %261 = vector.load %arg4[%c1_216, %c0_217, %c0_218] : memref<9x8x8xf32, #tpu.memory_space<vmem>>, vector<1x8x8xf32>
    %262 = vector.shape_cast %261 : vector<1x8x8xf32> to vector<8x8xf32>
    %cst_219 = arith.constant dense<0.000000e+00> : vector<8x256xf32>
    %263 = tpu.matmul %262, %260, %cst_219 {dimension_numbers = #tpu.dot_dimension_numbers<[1], [0], [0], [1], [0, 0, 1, 1], [], []>} : vector<8x8xf32>, vector<8x256xf32>, vector<8x256xf32> -> vector<8x256xf32>
    %264 = arith.addf %255, %263 : vector<8x256xf32>
    %c15_i32_220 = arith.constant 15 : i32
    %265 = tpu.dynamic_rotate %247 by %c15_i32_220 dim 1 : vector<8x256xf32>, i32 -> vector<8x256xf32>
    %c2_221 = arith.constant 2 : index
    %c0_222 = arith.constant 0 : index
    %c0_223 = arith.constant 0 : index
    %266 = vector.load %arg6[%c2_221, %c0_222, %c0_223] : memref<9x1x256xf32, #tpu.memory_space<vmem>>, vector<1x1x256xf32>
    %267 = vector.shape_cast %266 : vector<1x1x256xf32> to vector<1x256xf32>
    %268 = vector.broadcast %267 : vector<1x256xf32> to vector<8x256xf32>
    %269 = arith.mulf %265, %268 : vector<8x256xf32>
    %c2_224 = arith.constant 2 : index
    %c0_225 = arith.constant 0 : index
    %c0_226 = arith.constant 0 : index
    %270 = vector.load %arg4[%c2_224, %c0_225, %c0_226] : memref<9x8x8xf32, #tpu.memory_space<vmem>>, vector<1x8x8xf32>
    %271 = vector.shape_cast %270 : vector<1x8x8xf32> to vector<8x8xf32>
    %cst_227 = arith.constant dense<0.000000e+00> : vector<8x256xf32>
    %272 = tpu.matmul %271, %269, %cst_227 {dimension_numbers = #tpu.dot_dimension_numbers<[1], [0], [0], [1], [0, 0, 1, 1], [], []>} : vector<8x8xf32>, vector<8x256xf32>, vector<8x256xf32> -> vector<8x256xf32>
    %273 = arith.addf %264, %272 : vector<8x256xf32>
    %c1_i32_228 = arith.constant 1 : i32
    %274 = tpu.dynamic_rotate %247 by %c1_i32_228 dim 1 : vector<8x256xf32>, i32 -> vector<8x256xf32>
    %c3_229 = arith.constant 3 : index
    %c0_230 = arith.constant 0 : index
    %c0_231 = arith.constant 0 : index
    %275 = vector.load %arg6[%c3_229, %c0_230, %c0_231] : memref<9x1x256xf32, #tpu.memory_space<vmem>>, vector<1x1x256xf32>
    %276 = vector.shape_cast %275 : vector<1x1x256xf32> to vector<1x256xf32>
    %277 = vector.broadcast %276 : vector<1x256xf32> to vector<8x256xf32>
    %278 = arith.mulf %274, %277 : vector<8x256xf32>
    %c3_232 = arith.constant 3 : index
    %c0_233 = arith.constant 0 : index
    %c0_234 = arith.constant 0 : index
    %279 = vector.load %arg4[%c3_232, %c0_233, %c0_234] : memref<9x8x8xf32, #tpu.memory_space<vmem>>, vector<1x8x8xf32>
    %280 = vector.shape_cast %279 : vector<1x8x8xf32> to vector<8x8xf32>
    %cst_235 = arith.constant dense<0.000000e+00> : vector<8x256xf32>
    %281 = tpu.matmul %280, %278, %cst_235 {dimension_numbers = #tpu.dot_dimension_numbers<[1], [0], [0], [1], [0, 0, 1, 1], [], []>} : vector<8x8xf32>, vector<8x256xf32>, vector<8x256xf32> -> vector<8x256xf32>
    %282 = arith.addf %273, %281 : vector<8x256xf32>
    %c4_236 = arith.constant 4 : index
    %c0_237 = arith.constant 0 : index
    %c0_238 = arith.constant 0 : index
    %283 = vector.load %arg4[%c4_236, %c0_237, %c0_238] : memref<9x8x8xf32, #tpu.memory_space<vmem>>, vector<1x8x8xf32>
    %284 = vector.shape_cast %283 : vector<1x8x8xf32> to vector<8x8xf32>
    %cst_239 = arith.constant dense<0.000000e+00> : vector<8x256xf32>
    %285 = tpu.matmul %284, %247, %cst_239 {dimension_numbers = #tpu.dot_dimension_numbers<[1], [0], [0], [1], [0, 0, 1, 1], [], []>} : vector<8x8xf32>, vector<8x256xf32>, vector<8x256xf32> -> vector<8x256xf32>
    %286 = arith.addf %282, %285 : vector<8x256xf32>
    %c255_i32_240 = arith.constant 255 : i32
    %287 = tpu.dynamic_rotate %247 by %c255_i32_240 dim 1 : vector<8x256xf32>, i32 -> vector<8x256xf32>
    %c5_241 = arith.constant 5 : index
    %c0_242 = arith.constant 0 : index
    %c0_243 = arith.constant 0 : index
    %288 = vector.load %arg6[%c5_241, %c0_242, %c0_243] : memref<9x1x256xf32, #tpu.memory_space<vmem>>, vector<1x1x256xf32>
    %289 = vector.shape_cast %288 : vector<1x1x256xf32> to vector<1x256xf32>
    %290 = vector.broadcast %289 : vector<1x256xf32> to vector<8x256xf32>
    %291 = arith.mulf %287, %290 : vector<8x256xf32>
    %c5_244 = arith.constant 5 : index
    %c0_245 = arith.constant 0 : index
    %c0_246 = arith.constant 0 : index
    %292 = vector.load %arg4[%c5_244, %c0_245, %c0_246] : memref<9x8x8xf32, #tpu.memory_space<vmem>>, vector<1x8x8xf32>
    %293 = vector.shape_cast %292 : vector<1x8x8xf32> to vector<8x8xf32>
    %cst_247 = arith.constant dense<0.000000e+00> : vector<8x256xf32>
    %294 = tpu.matmul %293, %291, %cst_247 {dimension_numbers = #tpu.dot_dimension_numbers<[1], [0], [0], [1], [0, 0, 1, 1], [], []>} : vector<8x8xf32>, vector<8x256xf32>, vector<8x256xf32> -> vector<8x256xf32>
    %295 = arith.addf %286, %294 : vector<8x256xf32>
    %c241_i32_248 = arith.constant 241 : i32
    %296 = tpu.dynamic_rotate %247 by %c241_i32_248 dim 1 : vector<8x256xf32>, i32 -> vector<8x256xf32>
    %c6_249 = arith.constant 6 : index
    %c0_250 = arith.constant 0 : index
    %c0_251 = arith.constant 0 : index
    %297 = vector.load %arg6[%c6_249, %c0_250, %c0_251] : memref<9x1x256xf32, #tpu.memory_space<vmem>>, vector<1x1x256xf32>
    %298 = vector.shape_cast %297 : vector<1x1x256xf32> to vector<1x256xf32>
    %299 = vector.broadcast %298 : vector<1x256xf32> to vector<8x256xf32>
    %300 = arith.mulf %296, %299 : vector<8x256xf32>
    %c6_252 = arith.constant 6 : index
    %c0_253 = arith.constant 0 : index
    %c0_254 = arith.constant 0 : index
    %301 = vector.load %arg4[%c6_252, %c0_253, %c0_254] : memref<9x8x8xf32, #tpu.memory_space<vmem>>, vector<1x8x8xf32>
    %302 = vector.shape_cast %301 : vector<1x8x8xf32> to vector<8x8xf32>
    %cst_255 = arith.constant dense<0.000000e+00> : vector<8x256xf32>
    %303 = tpu.matmul %302, %300, %cst_255 {dimension_numbers = #tpu.dot_dimension_numbers<[1], [0], [0], [1], [0, 0, 1, 1], [], []>} : vector<8x8xf32>, vector<8x256xf32>, vector<8x256xf32> -> vector<8x256xf32>
    %304 = arith.addf %295, %303 : vector<8x256xf32>
    %c240_i32_256 = arith.constant 240 : i32
    %305 = tpu.dynamic_rotate %247 by %c240_i32_256 dim 1 : vector<8x256xf32>, i32 -> vector<8x256xf32>
    %c7_257 = arith.constant 7 : index
    %c0_258 = arith.constant 0 : index
    %c0_259 = arith.constant 0 : index
    %306 = vector.load %arg6[%c7_257, %c0_258, %c0_259] : memref<9x1x256xf32, #tpu.memory_space<vmem>>, vector<1x1x256xf32>
    %307 = vector.shape_cast %306 : vector<1x1x256xf32> to vector<1x256xf32>
    %308 = vector.broadcast %307 : vector<1x256xf32> to vector<8x256xf32>
    %309 = arith.mulf %305, %308 : vector<8x256xf32>
    %c7_260 = arith.constant 7 : index
    %c0_261 = arith.constant 0 : index
    %c0_262 = arith.constant 0 : index
    %310 = vector.load %arg4[%c7_260, %c0_261, %c0_262] : memref<9x8x8xf32, #tpu.memory_space<vmem>>, vector<1x8x8xf32>
    %311 = vector.shape_cast %310 : vector<1x8x8xf32> to vector<8x8xf32>
    %cst_263 = arith.constant dense<0.000000e+00> : vector<8x256xf32>
    %312 = tpu.matmul %311, %309, %cst_263 {dimension_numbers = #tpu.dot_dimension_numbers<[1], [0], [0], [1], [0, 0, 1, 1], [], []>} : vector<8x8xf32>, vector<8x256xf32>, vector<8x256xf32> -> vector<8x256xf32>
    %313 = arith.addf %304, %312 : vector<8x256xf32>
    %c239_i32_264 = arith.constant 239 : i32
    %314 = tpu.dynamic_rotate %247 by %c239_i32_264 dim 1 : vector<8x256xf32>, i32 -> vector<8x256xf32>
    %c8_265 = arith.constant 8 : index
    %c0_266 = arith.constant 0 : index
    %c0_267 = arith.constant 0 : index
    %315 = vector.load %arg6[%c8_265, %c0_266, %c0_267] : memref<9x1x256xf32, #tpu.memory_space<vmem>>, vector<1x1x256xf32>
    %316 = vector.shape_cast %315 : vector<1x1x256xf32> to vector<1x256xf32>
    %317 = vector.broadcast %316 : vector<1x256xf32> to vector<8x256xf32>
    %318 = arith.mulf %314, %317 : vector<8x256xf32>
    %c8_268 = arith.constant 8 : index
    %c0_269 = arith.constant 0 : index
    %c0_270 = arith.constant 0 : index
    %319 = vector.load %arg4[%c8_268, %c0_269, %c0_270] : memref<9x8x8xf32, #tpu.memory_space<vmem>>, vector<1x8x8xf32>
    %320 = vector.shape_cast %319 : vector<1x8x8xf32> to vector<8x8xf32>
    %cst_271 = arith.constant dense<0.000000e+00> : vector<8x256xf32>
    %321 = tpu.matmul %320, %318, %cst_271 {dimension_numbers = #tpu.dot_dimension_numbers<[1], [0], [0], [1], [0, 0, 1, 1], [], []>} : vector<8x8xf32>, vector<8x256xf32>, vector<8x256xf32> -> vector<8x256xf32>
    %322 = arith.addf %313, %321 : vector<8x256xf32>
    %c0_272 = arith.constant 0 : index
    %c0_273 = arith.constant 0 : index
    %323 = vector.load %arg5[%c0_272, %c0_273] : memref<8x1xf32, #tpu.memory_space<vmem>>, vector<8x1xf32>
    %324 = vector.broadcast %323 : vector<8x1xf32> to vector<8x256xf32>
    %325 = arith.addf %322, %324 : vector<8x256xf32>
    %326 = arith.addf %325, %167 : vector<8x256xf32>
    %cst_274 = arith.constant 0.000000e+00 : f32
    %327 = vector.broadcast %cst_274 : f32 to vector<8x256xf32>
    %328 = arith.maximumf %326, %327 : vector<8x256xf32>
    %c1_275 = arith.constant 1 : index
    %c0_276 = arith.constant 0 : index
    %c0_277 = arith.constant 0 : index
    %329 = vector.load %arg7[%c1_275, %c0_276, %c0_277] : memref<2x8x256xf32, #tpu.memory_space<vmem>>, vector<1x8x256xf32>
    %330 = vector.shape_cast %329 : vector<1x8x256xf32> to vector<8x256xf32>
    %331 = vector.shape_cast %328 : vector<8x256xf32> to vector<1x8x256xf32>
    tpu.vector_store %arg7[%c1_275, %c0_276, %c0_277], %331 {strides = array<i32>} : memref<2x8x256xf32, #tpu.memory_space<vmem>>, vector<1x8x256xf32>,
    return
  }
  func.func @transform_0(%arg0: i32) -> (i32, i32, i32) {
    %c0_i32 = arith.constant 0 : i32
    %c0_i32_0 = arith.constant 0 : i32
    %c0_i32_1 = arith.constant 0 : i32
    return %arg0, %c0_i32, %c0_i32_0 : i32, i32, i32
  }
  func.func @transform_1(%arg0: i32) -> (i32, i32, i32) {
    %c0_i32 = arith.constant 0 : i32
    %c0_i32_0 = arith.constant 0 : i32
    %c0_i32_1 = arith.constant 0 : i32
    %c0_i32_2 = arith.constant 0 : i32
    return %c0_i32, %c0_i32_0, %c0_i32_1 : i32, i32, i32
  }
  func.func @transform_2(%arg0: i32) -> (i32, i32) {
    %c0_i32 = arith.constant 0 : i32
    %c0_i32_0 = arith.constant 0 : i32
    %c0_i32_1 = arith.constant 0 : i32
    return %c0_i32, %c0_i32_0 : i32, i32
  }
  func.func @transform_3(%arg0: i32) -> (i32, i32, i32) {
    %c0_i32 = arith.constant 0 : i32
    %c0_i32_0 = arith.constant 0 : i32
    %c0_i32_1 = arith.constant 0 : i32
    %c0_i32_2 = arith.constant 0 : i32
    return %c0_i32, %c0_i32_0, %c0_i32_1 : i32, i32, i32
  }
  func.func @transform_4(%arg0: i32) -> (i32, i32) {
    %c0_i32 = arith.constant 0 : i32
    %c0_i32_0 = arith.constant 0 : i32
    %c0_i32_1 = arith.constant 0 : i32
    return %c0_i32, %c0_i32_0 : i32, i32
  }
  func.func @transform_5(%arg0: i32) -> (i32, i32, i32) {
    %c0_i32 = arith.constant 0 : i32
    %c0_i32_0 = arith.constant 0 : i32
    %c0_i32_1 = arith.constant 0 : i32
    %c0_i32_2 = arith.constant 0 : i32
    return %c0_i32, %c0_i32_0, %c0_i32_1 : i32, i32, i32
  }
  func.func @transform_6(%arg0: i32) -> (i32, i32, i32) {
    %c0_i32 = arith.constant 0 : i32
    %c0_i32_0 = arith.constant 0 : i32
    %c0_i32_1 = arith.constant 0 : i32
    return %arg0, %c0_i32, %c0_i32_0 : i32, i32, i32
  }
}

</mosaic_0001>

<llo_original>
// kernel: basic_block_2d_forward.1
$region0: #{basic_block_2d_forward.1}
  #allocation0 [shape = 'u32[]', space=smem, size = 0x4, offset = 0x4, fixed_abs, tag = 'smem constant byte address 0x4 - core index']
  #allocation1 [shape = 'u32[72,128]{1,0:T(1,128)}', space=vmem, size = 0x9000, scoped, tag = 'internal scratch']
  %s0 = inlined_call_operand.vmem [shape: f32[2,8,256], index: 0, kind: input, shape index: {}]
  %s1 = inlined_call_operand.vmem [shape: f32[9,8,8], index: 1, kind: input, shape index: {}]
  %s2 = inlined_call_operand.vmem [shape: f32[8,1], index: 2, kind: input, shape index: {}]
  %s3 = inlined_call_operand.vmem [shape: f32[9,8,8], index: 3, kind: input, shape index: {}]
  %s4 = inlined_call_operand.vmem [shape: f32[8,1], index: 4, kind: input, shape index: {}]
  %s5 = inlined_call_operand.vmem [shape: f32[9,1,256], index: 5, kind: input, shape index: {}]
  %s6 = inlined_call_operand.vmem [shape: f32[2,8,256], index: 6, kind: output, shape index: {}]
  %s7 = sld [smem:[#allocation0]]
  $region34: #{basic_block_2d_forward.1} parent=0
    _
  %s9 = ssub.s32 1, %s7
  %s10 = scalar_select 0, %s9, %s7
  // Predicated region
  $region2: #{basic_block_2d_forward.1} parent=0 // pred_check
    _
  $region3: #{basic_block_2d_forward.1} parent=0 // pred_check_branch
    %12 = sbr.rel (0) target = $region5
  $region4: #{basic_block_2d_forward.1} parent=0 // pred_region
    _
  $region5: #{basic_block_2d_forward.1} parent=0 // pred_fallthru
    _
  // Predicated region
  $region6: #{basic_block_2d_forward.1} parent=0 // pred_check
    _
  $region7: #{basic_block_2d_forward.1} parent=0 // pred_check_branch
    %14 = sbr.rel (0) target = $region9
  $region8: #{basic_block_2d_forward.1} parent=0 // pred_region
    _
  $region9: #{basic_block_2d_forward.1} parent=0 // pred_fallthru
    _
  // Predicated region
  $region10: #{basic_block_2d_forward.1} parent=0 // pred_check
    _
  $region11: #{basic_block_2d_forward.1} parent=0 // pred_check_branch
    %16 = sbr.rel (0) target = $region13
  $region12: #{basic_block_2d_forward.1} parent=0 // pred_region
    _
  $region13: #{basic_block_2d_forward.1} parent=0 // pred_fallthru
    _
  // Predicated region
  $region14: #{basic_block_2d_forward.1} parent=0 // pred_check
    _
  $region15: #{basic_block_2d_forward.1} parent=0 // pred_check_branch
    %18 = sbr.rel (0) target = $region17
  $region16: #{basic_block_2d_forward.1} parent=0 // pred_region
    _
  $region17: #{basic_block_2d_forward.1} parent=0 // pred_fallthru
    _
  // Predicated region
  $region18: #{basic_block_2d_forward.1} parent=0 // pred_check
    _
  $region19: #{basic_block_2d_forward.1} parent=0 // pred_check_branch
    %20 = sbr.rel (0) target = $region21
  $region20: #{basic_block_2d_forward.1} parent=0 // pred_region
    _
  $region21: #{basic_block_2d_forward.1} parent=0 // pred_fallthru
    _
  // Predicated region
  $region22: #{basic_block_2d_forward.1} parent=0 // pred_check
    _
  $region23: #{basic_block_2d_forward.1} parent=0 // pred_check_branch
    %22 = sbr.rel (0) target = $region25
  $region24: #{basic_block_2d_forward.1} parent=0 // pred_region
    _
  $region25: #{basic_block_2d_forward.1} parent=0 // pred_fallthru
    _
  %v23 = vld [vmem:[%s0] sm:$0xff]
  %v24 = vld [vmem:[%s0 + $0x8] sm:$0xff]
  %25 = vrot.lane.b32.xlu0 %v23, 17
  %v26 = vpop.permute.xlu0 %25
  %27 = vrot.lane.b32.xlu0 %v24, 17
  %v28 = vpop.permute.xlu0 %27
  %v29 = vlaneseq
  %v30 = vand.u32 %v29, 127
  %vm31 = vcmp.lt.s32.totalorder %v30, 17
  %v32 = vsel %vm31, %v26, %v28
  %v33 = vsel %vm31, %v28, %v26
  %v34 = vld [vmem:[%s5] sm:$0x3]
  %v36 = vperm.slane %v34, 0
  %v37 = vperm.slane %v34, 1
  %v40 = vmul.f32 %v33, %v36
  %v41 = vmul.f32 %v32, %v37
  %v42 = vld [vmem:[%s1] sm:$0xff]
  %43 = vrot.lane.b32.xlu0 %v23, 16
  %v44 = vpop.permute.xlu0 %43
  %45 = vrot.lane.b32.xlu0 %v24, 16
  %v46 = vpop.permute.xlu0 %45
  %vm47 = vcmp.lt.s32.totalorder %v30, 16
  %v48 = vsel %vm47, %v44, %v46
  %v49 = vsel %vm47, %v46, %v44
  %s50 = scalar_lea.vmem %s5, 2
  %v51 = vld [vmem:[%s50] sm:$0x3]
  %v53 = vperm.slane %v51, 0
  %v54 = vperm.slane %v51, 1
  %v57 = vmul.f32 %v49, %v53
  %v58 = vmul.f32 %v48, %v54
  %s59 = scalar_lea.vmem %s1, 8
  %v60 = vld [vmem:[%s59] sm:$0xff]
  %vm61 = vcmask 64512
  %v63 = vsel %vm61, %v60, 0
  %65 = vmatpush.msra.mxu0 0.0
  %66 = vmatpush.msra.mxu0 0.0
  %67 = vmatpush.msra.mxu0 0.0
  %68 = vmatpush.msra.mxu0 0.0
  %69 = vmatpush.msra.mxu0 0.0
  %70 = vmatpush.msra.mxu0 0.0
  %71 = vmatpush.msra.mxu0 0.0
  %72 = vmatpush.msra.mxu0 0.0
  %73 = vmatpush.msra.mxu0 0.0
  %74 = vmatpush.msra.mxu0 0.0
  %75 = vmatpush.msra.mxu0 0.0
  %76 = vmatpush.msra.mxu0 0.0
  %77 = vmatpush.msra.mxu0 0.0
  %78 = vmatpush.msra.mxu0 0.0
  %79 = vmatpush.msra.mxu0 0.0
  %80 = vmatpush.msra.mxu0 %v57
  %81 = vmatmul.f32.gmra.mxu0 %v63
  %v82 = vpop.f32.mrf.mxu0
  %v83 = vadd.f32 0.0, %v82
  %84 = vdwg.mxu0
  %85 = vmatpush.msra.mxu0 0.0
  %86 = vmatpush.msra.mxu0 0.0
  %87 = vmatpush.msra.mxu0 0.0
  %88 = vmatpush.msra.mxu0 0.0
  %89 = vmatpush.msra.mxu0 0.0
  %90 = vmatpush.msra.mxu0 0.0
  %91 = vmatpush.msra.mxu0 0.0
  %92 = vmatpush.msra.mxu0 0.0
  %93 = vmatpush.msra.mxu0 0.0
  %94 = vmatpush.msra.mxu0 0.0
  %95 = vmatpush.msra.mxu0 0.0
  %96 = vmatpush.msra.mxu0 0.0
  %97 = vmatpush.msra.mxu0 0.0
  %98 = vmatpush.msra.mxu0 0.0
  %99 = vmatpush.msra.mxu0 0.0
  %100 = vmatpush.msra.mxu0 %v58
  %101 = vmatmul.f32.gmra.mxu0 %v63
  %v102 = vpop.f32.mrf.mxu0
  %v103 = vadd.f32 0.0, %v102
  %104 = vdwg.mxu0
  %v106 = vsel %vm61, %v42, 0
  %108 = vmatpush.msra.mxu0 0.0
  %109 = vmatpush.msra.mxu0 0.0
  %110 = vmatpush.msra.mxu0 0.0
  %111 = vmatpush.msra.mxu0 0.0
  %112 = vmatpush.msra.mxu0 0.0
  %113 = vmatpush.msra.mxu0 0.0
  %114 = vmatpush.msra.mxu0 0.0
  %115 = vmatpush.msra.mxu0 0.0
  %116 = vmatpush.msra.mxu0 0.0
  %117 = vmatpush.msra.mxu0 0.0
  %118 = vmatpush.msra.mxu0 0.0
  %119 = vmatpush.msra.mxu0 0.0
  %120 = vmatpush.msra.mxu0 0.0
  %121 = vmatpush.msra.mxu0 0.0
  %122 = vmatpush.msra.mxu0 0.0
  %123 = vmatpush.msra.mxu0 %v40
  %124 = vmatmul.f32.gmra.mxu0 %v106
  %v125 = vpop.f32.mrf.mxu0
  %v126 = vadd.f32 %v83, %v125
  %127 = vdwg.mxu0
  %128 = vmatpush.msra.mxu0 0.0
  %129 = vmatpush.msra.mxu0 0.0
  %130 = vmatpush.msra.mxu0 0.0
  %131 = vmatpush.msra.mxu0 0.0
  %132 = vmatpush.msra.mxu0 0.0
  %133 = vmatpush.msra.mxu0 0.0
  %134 = vmatpush.msra.mxu0 0.0
  %135 = vmatpush.msra.mxu0 0.0
  %136 = vmatpush.msra.mxu0 0.0
  %137 = vmatpush.msra.mxu0 0.0
  %138 = vmatpush.msra.mxu0 0.0
  %139 = vmatpush.msra.mxu0 0.0
  %140 = vmatpush.msra.mxu0 0.0
  %141 = vmatpush.msra.mxu0 0.0
  %142 = vmatpush.msra.mxu0 0.0
  %143 = vmatpush.msra.mxu0 %v41
  %144 = vmatmul.f32.gmra.mxu0 %v106
  %v145 = vpop.f32.mrf.mxu0
  %v146 = vadd.f32 %v103, %v145
  %147 = vdwg.mxu0
  %148 = vrot.lane.b32.xlu0 %v23, 15
  %v149 = vpop.permute.xlu0 %148
  %150 = vrot.lane.b32.xlu0 %v24, 15
  %v151 = vpop.permute.xlu0 %150
  %vm152 = vcmp.lt.s32.totalorder %v30, 15
  %v153 = vsel %vm152, %v149, %v151
  %v154 = vsel %vm152, %v151, %v149
  %s155 = scalar_lea.vmem %s5, 4
  %v156 = vld [vmem:[%s155] sm:$0x3]
  %v158 = vperm.slane %v156, 0
  %v159 = vperm.slane %v156, 1
  %v162 = vmul.f32 %v154, %v158
  %v163 = vmul.f32 %v153, %v159
  %s164 = scalar_lea.vmem %s1, 16
  %v165 = vld [vmem:[%s164] sm:$0xff]
  %v167 = vsel %vm61, %v165, 0
  %169 = vmatpush.msra.mxu0 0.0
  %170 = vmatpush.msra.mxu0 0.0
  %171 = vmatpush.msra.mxu0 0.0
  %172 = vmatpush.msra.mxu0 0.0
  %173 = vmatpush.msra.mxu0 0.0
  %174 = vmatpush.msra.mxu0 0.0
  %175 = vmatpush.msra.mxu0 0.0
  %176 = vmatpush.msra.mxu0 0.0
  %177 = vmatpush.msra.mxu0 0.0
  %178 = vmatpush.msra.mxu0 0.0
  %179 = vmatpush.msra.mxu0 0.0
  %180 = vmatpush.msra.mxu0 0.0
  %181 = vmatpush.msra.mxu0 0.0
  %182 = vmatpush.msra.mxu0 0.0
  %183 = vmatpush.msra.mxu0 0.0
  %184 = vmatpush.msra.mxu0 %v162
  %185 = vmatmul.f32.gmra.mxu0 %v167
  %v186 = vpop.f32.mrf.mxu0
  %v187 = vadd.f32 0.0, %v186
  %188 = vdwg.mxu0
  %189 = vmatpush.msra.mxu0 0.0
  %190 = vmatpush.msra.mxu0 0.0
  %191 = vmatpush.msra.mxu0 0.0
  %192 = vmatpush.msra.mxu0 0.0
  %193 = vmatpush.msra.mxu0 0.0
  %194 = vmatpush.msra.mxu0 0.0
  %195 = vmatpush.msra.mxu0 0.0
  %196 = vmatpush.msra.mxu0 0.0
  %197 = vmatpush.msra.mxu0 0.0
  %198 = vmatpush.msra.mxu0 0.0
  %199 = vmatpush.msra.mxu0 0.0
  %200 = vmatpush.msra.mxu0 0.0
  %201 = vmatpush.msra.mxu0 0.0
  %202 = vmatpush.msra.mxu0 0.0
  %203 = vmatpush.msra.mxu0 0.0
  %204 = vmatpush.msra.mxu0 %v163
  %205 = vmatmul.f32.gmra.mxu0 %v167
  %v206 = vpop.f32.mrf.mxu0
  %v207 = vadd.f32 0.0, %v206
  %208 = vdwg.mxu0
  %v209 = vadd.f32 %v126, %v187
  %v210 = vadd.f32 %v146, %v207
  %211 = vrot.lane.b32.xlu0 %v23, 1
  %v212 = vpop.permute.xlu0 %211
  %213 = vrot.lane.b32.xlu0 %v24, 1
  %v214 = vpop.permute.xlu0 %213
  %vm215 = vcmp.lt.s32.totalorder %v30, 1
  %v216 = vsel %vm215, %v212, %v214
  %v217 = vsel %vm215, %v214, %v212
  %s218 = scalar_lea.vmem %s5, 6
  %v219 = vld [vmem:[%s218] sm:$0x3]
  %v221 = vperm.slane %v219, 0
  %v222 = vperm.slane %v219, 1
  %v225 = vmul.f32 %v217, %v221
  %v226 = vmul.f32 %v216, %v222
  %s227 = scalar_lea.vmem %s1, 24
  %v228 = vld [vmem:[%s227] sm:$0xff]
  %v230 = vsel %vm61, %v228, 0
  %232 = vmatpush.msra.mxu0 0.0
  %233 = vmatpush.msra.mxu0 0.0
  %234 = vmatpush.msra.mxu0 0.0
  %235 = vmatpush.msra.mxu0 0.0
  %236 = vmatpush.msra.mxu0 0.0
  %237 = vmatpush.msra.mxu0 0.0
  %238 = vmatpush.msra.mxu0 0.0
  %239 = vmatpush.msra.mxu0 0.0
  %240 = vmatpush.msra.mxu0 0.0
  %241 = vmatpush.msra.mxu0 0.0
  %242 = vmatpush.msra.mxu0 0.0
  %243 = vmatpush.msra.mxu0 0.0
  %244 = vmatpush.msra.mxu0 0.0
  %245 = vmatpush.msra.mxu0 0.0
  %246 = vmatpush.msra.mxu0 0.0
  %247 = vmatpush.msra.mxu0 %v225
  %248 = vmatmul.f32.gmra.mxu0 %v230
  %v249 = vpop.f32.mrf.mxu0
  %v250 = vadd.f32 0.0, %v249
  %251 = vdwg.mxu0
  %252 = vmatpush.msra.mxu0 0.0
  %253 = vmatpush.msra.mxu0 0.0
  %254 = vmatpush.msra.mxu0 0.0
  %255 = vmatpush.msra.mxu0 0.0
  %256 = vmatpush.msra.mxu0 0.0
  %257 = vmatpush.msra.mxu0 0.0
  %258 = vmatpush.msra.mxu0 0.0
  %259 = vmatpush.msra.mxu0 0.0
  %260 = vmatpush.msra.mxu0 0.0
  %261 = vmatpush.msra.mxu0 0.0
  %262 = vmatpush.msra.mxu0 0.0
  %263 = vmatpush.msra.mxu0 0.0
  %264 = vmatpush.msra.mxu0 0.0
  %265 = vmatpush.msra.mxu0 0.0
  %266 = vmatpush.msra.mxu0 0.0
  %267 = vmatpush.msra.mxu0 %v226
  %268 = vmatmul.f32.gmra.mxu0 %v230
  %v269 = vpop.f32.mrf.mxu0
  %v270 = vadd.f32 0.0, %v269
  %271 = vdwg.mxu0
  %v272 = vadd.f32 %v209, %v250
  %v273 = vadd.f32 %v210, %v270
  %s274 = scalar_lea.vmem %s1, 32
  %v275 = vld [vmem:[%s274] sm:$0xff]
  %v277 = vsel %vm61, %v275, 0
  %279 = vmatpush.msra.mxu0 0.0
  %280 = vmatpush.msra.mxu0 0.0
  %281 = vmatpush.msra.mxu0 0.0
  %282 = vmatpush.msra.mxu0 0.0
  %283 = vmatpush.msra.mxu0 0.0
  %284 = vmatpush.msra.mxu0 0.0
  %285 = vmatpush.msra.mxu0 0.0
  %286 = vmatpush.msra.mxu0 0.0
  %287 = vmatpush.msra.mxu0 0.0
  %288 = vmatpush.msra.mxu0 0.0
  %289 = vmatpush.msra.mxu0 0.0
  %290 = vmatpush.msra.mxu0 0.0
  %291 = vmatpush.msra.mxu0 0.0
  %292 = vmatpush.msra.mxu0 0.0
  %293 = vmatpush.msra.mxu0 0.0
  %294 = vmatpush.msra.mxu0 %v23
  %295 = vmatmul.f32.gmra.mxu0 %v277
  %v296 = vpop.f32.mrf.mxu0
  %v297 = vadd.f32 0.0, %v296
  %298 = vdwg.mxu0
  %299 = vmatpush.msra.mxu0 0.0
  %300 = vmatpush.msra.mxu0 0.0
  %301 = vmatpush.msra.mxu0 0.0
  %302 = vmatpush.msra.mxu0 0.0
  %303 = vmatpush.msra.mxu0 0.0
  %304 = vmatpush.msra.mxu0 0.0
  %305 = vmatpush.msra.mxu0 0.0
  %306 = vmatpush.msra.mxu0 0.0
  %307 = vmatpush.msra.mxu0 0.0
  %308 = vmatpush.msra.mxu0 0.0
  %309 = vmatpush.msra.mxu0 0.0
  %310 = vmatpush.msra.mxu0 0.0
  %311 = vmatpush.msra.mxu0 0.0
  %312 = vmatpush.msra.mxu0 0.0
  %313 = vmatpush.msra.mxu0 0.0
  %314 = vmatpush.msra.mxu0 %v24
  %315 = vmatmul.f32.gmra.mxu0 %v277
  %v316 = vpop.f32.mrf.mxu0
  %v317 = vadd.f32 0.0, %v316
  %318 = vdwg.mxu0
  %v319 = vadd.f32 %v272, %v297
  %v320 = vadd.f32 %v273, %v317
  %321 = vrot.lane.b32.xlu0 %v23, 127
  %v322 = vpop.permute.xlu0 %321
  %323 = vrot.lane.b32.xlu0 %v24, 127
  %v324 = vpop.permute.xlu0 %323
  %vm325 = vcmp.lt.s32.totalorder %v30, 127
  %v326 = vsel %vm325, %v322, %v324
  %v327 = vsel %vm325, %v324, %v322
  %s328 = scalar_lea.vmem %s5, 10
  %v329 = vld [vmem:[%s328] sm:$0x3]
  %v331 = vperm.slane %v329, 0
  %v332 = vperm.slane %v329, 1
  %v335 = vmul.f32 %v326, %v331
  %v336 = vmul.f32 %v327, %v332
  %s337 = scalar_lea.vmem %s1, 40
  %v338 = vld [vmem:[%s337] sm:$0xff]
  %v340 = vsel %vm61, %v338, 0
  %342 = vmatpush.msra.mxu0 0.0
  %343 = vmatpush.msra.mxu0 0.0
  %344 = vmatpush.msra.mxu0 0.0
  %345 = vmatpush.msra.mxu0 0.0
  %346 = vmatpush.msra.mxu0 0.0
  %347 = vmatpush.msra.mxu0 0.0
  %348 = vmatpush.msra.mxu0 0.0
  %349 = vmatpush.msra.mxu0 0.0
  %350 = vmatpush.msra.mxu0 0.0
  %351 = vmatpush.msra.mxu0 0.0
  %352 = vmatpush.msra.mxu0 0.0
  %353 = vmatpush.msra.mxu0 0.0
  %354 = vmatpush.msra.mxu0 0.0
  %355 = vmatpush.msra.mxu0 0.0
  %356 = vmatpush.msra.mxu0 0.0
  %357 = vmatpush.msra.mxu0 %v335
  %358 = vmatmul.f32.gmra.mxu0 %v340
  %v359 = vpop.f32.mrf.mxu0
  %v360 = vadd.f32 0.0, %v359
  %361 = vdwg.mxu0
  %362 = vmatpush.msra.mxu0 0.0
  %363 = vmatpush.msra.mxu0 0.0
  %364 = vmatpush.msra.mxu0 0.0
  %365 = vmatpush.msra.mxu0 0.0
  %366 = vmatpush.msra.mxu0 0.0
  %367 = vmatpush.msra.mxu0 0.0
  %368 = vmatpush.msra.mxu0 0.0
  %369 = vmatpush.msra.mxu0 0.0
  %370 = vmatpush.msra.mxu0 0.0
  %371 = vmatpush.msra.mxu0 0.0
  %372 = vmatpush.msra.mxu0 0.0
  %373 = vmatpush.msra.mxu0 0.0
  %374 = vmatpush.msra.mxu0 0.0
  %375 = vmatpush.msra.mxu0 0.0
  %376 = vmatpush.msra.mxu0 0.0
  %377 = vmatpush.msra.mxu0 %v336
  %378 = vmatmul.f32.gmra.mxu0 %v340
  %v379 = vpop.f32.mrf.mxu0
  %v380 = vadd.f32 0.0, %v379
  %381 = vdwg.mxu0
  %v382 = vadd.f32 %v319, %v360
  %v383 = vadd.f32 %v320, %v380
  %384 = vrot.lane.b32.xlu0 %v23, 113
  %v385 = vpop.permute.xlu0 %384
  %386 = vrot.lane.b32.xlu0 %v24, 113
  %v387 = vpop.permute.xlu0 %386
  %vm388 = vcmp.lt.s32.totalorder %v30, 113
  %v389 = vsel %vm388, %v385, %v387
  %v390 = vsel %vm388, %v387, %v385
  %s391 = scalar_lea.vmem %s5, 12
  %v392 = vld [vmem:[%s391] sm:$0x3]
  %v394 = vperm.slane %v392, 0
  %v395 = vperm.slane %v392, 1
  %v398 = vmul.f32 %v389, %v394
  %v399 = vmul.f32 %v390, %v395
  %s400 = scalar_lea.vmem %s1, 48
  %v401 = vld [vmem:[%s400] sm:$0xff]
  %v403 = vsel %vm61, %v401, 0
  %405 = vmatpush.msra.mxu0 0.0
  %406 = vmatpush.msra.mxu0 0.0
  %407 = vmatpush.msra.mxu0 0.0
  %408 = vmatpush.msra.mxu0 0.0
  %409 = vmatpush.msra.mxu0 0.0
  %410 = vmatpush.msra.mxu0 0.0
  %411 = vmatpush.msra.mxu0 0.0
  %412 = vmatpush.msra.mxu0 0.0
  %413 = vmatpush.msra.mxu0 0.0
  %414 = vmatpush.msra.mxu0 0.0
  %415 = vmatpush.msra.mxu0 0.0
  %416 = vmatpush.msra.mxu0 0.0
  %417 = vmatpush.msra.mxu0 0.0
  %418 = vmatpush.msra.mxu0 0.0
  %419 = vmatpush.msra.mxu0 0.0
  %420 = vmatpush.msra.mxu0 %v398
  %421 = vmatmul.f32.gmra.mxu0 %v403
  %v422 = vpop.f32.mrf.mxu0
  %v423 = vadd.f32 0.0, %v422
  %424 = vdwg.mxu0
  %425 = vmatpush.msra.mxu0 0.0
  %426 = vmatpush.msra.mxu0 0.0
  %427 = vmatpush.msra.mxu0 0.0
  %428 = vmatpush.msra.mxu0 0.0
  %429 = vmatpush.msra.mxu0 0.0
  %430 = vmatpush.msra.mxu0 0.0
  %431 = vmatpush.msra.mxu0 0.0
  %432 = vmatpush.msra.mxu0 0.0
  %433 = vmatpush.msra.mxu0 0.0
  %434 = vmatpush.msra.mxu0 0.0
  %435 = vmatpush.msra.mxu0 0.0
  %436 = vmatpush.msra.mxu0 0.0
  %437 = vmatpush.msra.mxu0 0.0
  %438 = vmatpush.msra.mxu0 0.0
  %439 = vmatpush.msra.mxu0 0.0
  %440 = vmatpush.msra.mxu0 %v399
  %441 = vmatmul.f32.gmra.mxu0 %v403
  %v442 = vpop.f32.mrf.mxu0
  %v443 = vadd.f32 0.0, %v442
  %444 = vdwg.mxu0
  %v445 = vadd.f32 %v382, %v423
  %v446 = vadd.f32 %v383, %v443
  %447 = vrot.lane.b32.xlu0 %v23, 112
  %v448 = vpop.permute.xlu0 %447
  %449 = vrot.lane.b32.xlu0 %v24, 112
  %v450 = vpop.permute.xlu0 %449
  %vm451 = vcmp.lt.s32.totalorder %v30, 112
  %v452 = vsel %vm451, %v448, %v450
  %v453 = vsel %vm451, %v450, %v448
  %s454 = scalar_lea.vmem %s5, 14
  %v455 = vld [vmem:[%s454] sm:$0x3]
  %v457 = vperm.slane %v455, 0
  %v458 = vperm.slane %v455, 1
  %v461 = vmul.f32 %v452, %v457
  %v462 = vmul.f32 %v453, %v458
  %s463 = scalar_lea.vmem %s1, 56
  %v464 = vld [vmem:[%s463] sm:$0xff]
  %v466 = vsel %vm61, %v464, 0
  %468 = vmatpush.msra.mxu0 0.0
  %469 = vmatpush.msra.mxu0 0.0
  %470 = vmatpush.msra.mxu0 0.0
  %471 = vmatpush.msra.mxu0 0.0
  %472 = vmatpush.msra.mxu0 0.0
  %473 = vmatpush.msra.mxu0 0.0
  %474 = vmatpush.msra.mxu0 0.0
  %475 = vmatpush.msra.mxu0 0.0
  %476 = vmatpush.msra.mxu0 0.0
  %477 = vmatpush.msra.mxu0 0.0
  %478 = vmatpush.msra.mxu0 0.0
  %479 = vmatpush.msra.mxu0 0.0
  %480 = vmatpush.msra.mxu0 0.0
  %481 = vmatpush.msra.mxu0 0.0
  %482 = vmatpush.msra.mxu0 0.0
  %483 = vmatpush.msra.mxu0 %v461
  %484 = vmatmul.f32.gmra.mxu0 %v466
  %v485 = vpop.f32.mrf.mxu0
  %v486 = vadd.f32 0.0, %v485
  %487 = vdwg.mxu0
  %488 = vmatpush.msra.mxu0 0.0
  %489 = vmatpush.msra.mxu0 0.0
  %490 = vmatpush.msra.mxu0 0.0
  %491 = vmatpush.msra.mxu0 0.0
  %492 = vmatpush.msra.mxu0 0.0
  %493 = vmatpush.msra.mxu0 0.0
  %494 = vmatpush.msra.mxu0 0.0
  %495 = vmatpush.msra.mxu0 0.0
  %496 = vmatpush.msra.mxu0 0.0
  %497 = vmatpush.msra.mxu0 0.0
  %498 = vmatpush.msra.mxu0 0.0
  %499 = vmatpush.msra.mxu0 0.0
  %500 = vmatpush.msra.mxu0 0.0
  %501 = vmatpush.msra.mxu0 0.0
  %502 = vmatpush.msra.mxu0 0.0
  %503 = vmatpush.msra.mxu0 %v462
  %504 = vmatmul.f32.gmra.mxu0 %v466
  %v505 = vpop.f32.mrf.mxu0
  %v506 = vadd.f32 0.0, %v505
  %507 = vdwg.mxu0
  %v508 = vadd.f32 %v445, %v486
  %v509 = vadd.f32 %v446, %v506
  %510 = vrot.lane.b32.xlu0 %v23, 111
  %v511 = vpop.permute.xlu0 %510
  %512 = vrot.lane.b32.xlu0 %v24, 111
  %v513 = vpop.permute.xlu0 %512
  %vm514 = vcmp.lt.s32.totalorder %v30, 111
  %v515 = vsel %vm514, %v511, %v513
  %v516 = vsel %vm514, %v513, %v511
  %s517 = scalar_lea.vmem %s5, 16
  %v518 = vld [vmem:[%s517] sm:$0x3]
  %v520 = vperm.slane %v518, 0
  %v521 = vperm.slane %v518, 1
  %v524 = vmul.f32 %v515, %v520
  %v525 = vmul.f32 %v516, %v521
  %s526 = scalar_lea.vmem %s1, 64
  %v527 = vld [vmem:[%s526] sm:$0xff]
  %v529 = vsel %vm61, %v527, 0
  %531 = vmatpush.msra.mxu0 0.0
  %532 = vmatpush.msra.mxu0 0.0
  %533 = vmatpush.msra.mxu0 0.0
  %534 = vmatpush.msra.mxu0 0.0
  %535 = vmatpush.msra.mxu0 0.0
  %536 = vmatpush.msra.mxu0 0.0
  %537 = vmatpush.msra.mxu0 0.0
  %538 = vmatpush.msra.mxu0 0.0
  %539 = vmatpush.msra.mxu0 0.0
  %540 = vmatpush.msra.mxu0 0.0
  %541 = vmatpush.msra.mxu0 0.0
  %542 = vmatpush.msra.mxu0 0.0
  %543 = vmatpush.msra.mxu0 0.0
  %544 = vmatpush.msra.mxu0 0.0
  %545 = vmatpush.msra.mxu0 0.0
  %546 = vmatpush.msra.mxu0 %v524
  %547 = vmatmul.f32.gmra.mxu0 %v529
  %v548 = vpop.f32.mrf.mxu0
  %v549 = vadd.f32 0.0, %v548
  %550 = vdwg.mxu0
  %551 = vmatpush.msra.mxu0 0.0
  %552 = vmatpush.msra.mxu0 0.0
  %553 = vmatpush.msra.mxu0 0.0
  %554 = vmatpush.msra.mxu0 0.0
  %555 = vmatpush.msra.mxu0 0.0
  %556 = vmatpush.msra.mxu0 0.0
  %557 = vmatpush.msra.mxu0 0.0
  %558 = vmatpush.msra.mxu0 0.0
  %559 = vmatpush.msra.mxu0 0.0
  %560 = vmatpush.msra.mxu0 0.0
  %561 = vmatpush.msra.mxu0 0.0
  %562 = vmatpush.msra.mxu0 0.0
  %563 = vmatpush.msra.mxu0 0.0
  %564 = vmatpush.msra.mxu0 0.0
  %565 = vmatpush.msra.mxu0 0.0
  %566 = vmatpush.msra.mxu0 %v525
  %567 = vmatmul.f32.gmra.mxu0 %v529
  %v568 = vpop.f32.mrf.mxu0
  %v569 = vadd.f32 0.0, %v568
  %570 = vdwg.mxu0
  %v571 = vadd.f32 %v508, %v549
  %v572 = vadd.f32 %v509, %v569
  %v573 = vld [vmem:[%s2] sm:$0xff]
  %575 = vset.pattern.permute.xlu0 0
  %576 = vperm.xlu0 %575, %v573
  %v577 = vpop.permute.xlu0 %576
  %v579 = vadd.f32 %v571, %v577
  %v580 = vadd.f32 %v572, %v577
  %v581 = vmax.f32 %v579, 0.0
  %v582 = vmax.f32 %v580, 0.0
  %583 = vrot.lane.b32.xlu0 %v581, 17
  %v584 = vpop.permute.xlu0 %583
  %585 = vrot.lane.b32.xlu0 %v582, 17
  %v586 = vpop.permute.xlu0 %585
  %v587 = vsel %vm31, %v584, %v586
  %v588 = vsel %vm31, %v586, %v584
  %v589 = vmul.f32 %v588, %v36
  %v590 = vmul.f32 %v587, %v37
  %v591 = vld [vmem:[%s3] sm:$0xff]
  %592 = vrot.lane.b32.xlu0 %v581, 16
  %v593 = vpop.permute.xlu0 %592
  %594 = vrot.lane.b32.xlu0 %v582, 16
  %v595 = vpop.permute.xlu0 %594
  %v596 = vsel %vm47, %v593, %v595
  %v597 = vsel %vm47, %v595, %v593
  %v598 = vmul.f32 %v597, %v53
  %v599 = vmul.f32 %v596, %v54
  %s600 = scalar_lea.vmem %s3, 8
  %v601 = vld [vmem:[%s600] sm:$0xff]
  %v603 = vsel %vm61, %v601, 0
  %605 = vmatpush.msra.mxu0 0.0
  %606 = vmatpush.msra.mxu0 0.0
  %607 = vmatpush.msra.mxu0 0.0
  %608 = vmatpush.msra.mxu0 0.0
  %609 = vmatpush.msra.mxu0 0.0
  %610 = vmatpush.msra.mxu0 0.0
  %611 = vmatpush.msra.mxu0 0.0
  %612 = vmatpush.msra.mxu0 0.0
  %613 = vmatpush.msra.mxu0 0.0
  %614 = vmatpush.msra.mxu0 0.0
  %615 = vmatpush.msra.mxu0 0.0
  %616 = vmatpush.msra.mxu0 0.0
  %617 = vmatpush.msra.mxu0 0.0
  %618 = vmatpush.msra.mxu0 0.0
  %619 = vmatpush.msra.mxu0 0.0
  %620 = vmatpush.msra.mxu0 %v598
  %621 = vmatmul.f32.gmra.mxu0 %v603
  %v622 = vpop.f32.mrf.mxu0
  %v623 = vadd.f32 0.0, %v622
  %624 = vdwg.mxu0
  %625 = vmatpush.msra.mxu0 0.0
  %626 = vmatpush.msra.mxu0 0.0
  %627 = vmatpush.msra.mxu0 0.0
  %628 = vmatpush.msra.mxu0 0.0
  %629 = vmatpush.msra.mxu0 0.0
  %630 = vmatpush.msra.mxu0 0.0
  %631 = vmatpush.msra.mxu0 0.0
  %632 = vmatpush.msra.mxu0 0.0
  %633 = vmatpush.msra.mxu0 0.0
  %634 = vmatpush.msra.mxu0 0.0
  %635 = vmatpush.msra.mxu0 0.0
  %636 = vmatpush.msra.mxu0 0.0
  %637 = vmatpush.msra.mxu0 0.0
  %638 = vmatpush.msra.mxu0 0.0
  %639 = vmatpush.msra.mxu0 0.0
  %640 = vmatpush.msra.mxu0 %v599
  %641 = vmatmul.f32.gmra.mxu0 %v603
  %v642 = vpop.f32.mrf.mxu0
  %v643 = vadd.f32 0.0, %v642
  %644 = vdwg.mxu0
  %v646 = vsel %vm61, %v591, 0
  %648 = vmatpush.msra.mxu0 0.0
  %649 = vmatpush.msra.mxu0 0.0
  %650 = vmatpush.msra.mxu0 0.0
  %651 = vmatpush.msra.mxu0 0.0
  %652 = vmatpush.msra.mxu0 0.0
  %653 = vmatpush.msra.mxu0 0.0
  %654 = vmatpush.msra.mxu0 0.0
  %655 = vmatpush.msra.mxu0 0.0
  %656 = vmatpush.msra.mxu0 0.0
  %657 = vmatpush.msra.mxu0 0.0
  %658 = vmatpush.msra.mxu0 0.0
  %659 = vmatpush.msra.mxu0 0.0
  %660 = vmatpush.msra.mxu0 0.0
  %661 = vmatpush.msra.mxu0 0.0
  %662 = vmatpush.msra.mxu0 0.0
  %663 = vmatpush.msra.mxu0 %v589
  %664 = vmatmul.f32.gmra.mxu0 %v646
  %v665 = vpop.f32.mrf.mxu0
  %v666 = vadd.f32 %v623, %v665
  %667 = vdwg.mxu0
  %668 = vmatpush.msra.mxu0 0.0
  %669 = vmatpush.msra.mxu0 0.0
  %670 = vmatpush.msra.mxu0 0.0
  %671 = vmatpush.msra.mxu0 0.0
  %672 = vmatpush.msra.mxu0 0.0
  %673 = vmatpush.msra.mxu0 0.0
  %674 = vmatpush.msra.mxu0 0.0
  %675 = vmatpush.msra.mxu0 0.0
  %676 = vmatpush.msra.mxu0 0.0
  %677 = vmatpush.msra.mxu0 0.0
  %678 = vmatpush.msra.mxu0 0.0
  %679 = vmatpush.msra.mxu0 0.0
  %680 = vmatpush.msra.mxu0 0.0
  %681 = vmatpush.msra.mxu0 0.0
  %682 = vmatpush.msra.mxu0 0.0
  %683 = vmatpush.msra.mxu0 %v590
  %684 = vmatmul.f32.gmra.mxu0 %v646
  %v685 = vpop.f32.mrf.mxu0
  %v686 = vadd.f32 %v643, %v685
  %687 = vdwg.mxu0
  %688 = vrot.lane.b32.xlu0 %v581, 15
  %v689 = vpop.permute.xlu0 %688
  %690 = vrot.lane.b32.xlu0 %v582, 15
  %v691 = vpop.permute.xlu0 %690
  %v692 = vsel %vm152, %v689, %v691
  %v693 = vsel %vm152, %v691, %v689
  %v694 = vmul.f32 %v693, %v158
  %v695 = vmul.f32 %v692, %v159
  %s696 = scalar_lea.vmem %s3, 16
  %v697 = vld [vmem:[%s696] sm:$0xff]
  %v699 = vsel %vm61, %v697, 0
  %701 = vmatpush.msra.mxu0 0.0
  %702 = vmatpush.msra.mxu0 0.0
  %703 = vmatpush.msra.mxu0 0.0
  %704 = vmatpush.msra.mxu0 0.0
  %705 = vmatpush.msra.mxu0 0.0
  %706 = vmatpush.msra.mxu0 0.0
  %707 = vmatpush.msra.mxu0 0.0
  %708 = vmatpush.msra.mxu0 0.0
  %709 = vmatpush.msra.mxu0 0.0
  %710 = vmatpush.msra.mxu0 0.0
  %711 = vmatpush.msra.mxu0 0.0
  %712 = vmatpush.msra.mxu0 0.0
  %713 = vmatpush.msra.mxu0 0.0
  %714 = vmatpush.msra.mxu0 0.0
  %715 = vmatpush.msra.mxu0 0.0
  %716 = vmatpush.msra.mxu0 %v694
  %717 = vmatmul.f32.gmra.mxu0 %v699
  %v718 = vpop.f32.mrf.mxu0
  %v719 = vadd.f32 0.0, %v718
  %720 = vdwg.mxu0
  %721 = vmatpush.msra.mxu0 0.0
  %722 = vmatpush.msra.mxu0 0.0
  %723 = vmatpush.msra.mxu0 0.0
  %724 = vmatpush.msra.mxu0 0.0
  %725 = vmatpush.msra.mxu0 0.0
  %726 = vmatpush.msra.mxu0 0.0
  %727 = vmatpush.msra.mxu0 0.0
  %728 = vmatpush.msra.mxu0 0.0
  %729 = vmatpush.msra.mxu0 0.0
  %730 = vmatpush.msra.mxu0 0.0
  %731 = vmatpush.msra.mxu0 0.0
  %732 = vmatpush.msra.mxu0 0.0
  %733 = vmatpush.msra.mxu0 0.0
  %734 = vmatpush.msra.mxu0 0.0
  %735 = vmatpush.msra.mxu0 0.0
  %736 = vmatpush.msra.mxu0 %v695
  %737 = vmatmul.f32.gmra.mxu0 %v699
  %v738 = vpop.f32.mrf.mxu0
  %v739 = vadd.f32 0.0, %v738
  %740 = vdwg.mxu0
  %v741 = vadd.f32 %v666, %v719
  %v742 = vadd.f32 %v686, %v739
  %743 = vrot.lane.b32.xlu0 %v581, 1
  %v744 = vpop.permute.xlu0 %743
  %745 = vrot.lane.b32.xlu0 %v582, 1
  %v746 = vpop.permute.xlu0 %745
  %v747 = vsel %vm215, %v744, %v746
  %v748 = vsel %vm215, %v746, %v744
  %v749 = vmul.f32 %v748, %v221
  %v750 = vmul.f32 %v747, %v222
  %s751 = scalar_lea.vmem %s3, 24
  %v752 = vld [vmem:[%s751] sm:$0xff]
  %v754 = vsel %vm61, %v752, 0
  %756 = vmatpush.msra.mxu0 0.0
  %757 = vmatpush.msra.mxu0 0.0
  %758 = vmatpush.msra.mxu0 0.0
  %759 = vmatpush.msra.mxu0 0.0
  %760 = vmatpush.msra.mxu0 0.0
  %761 = vmatpush.msra.mxu0 0.0
  %762 = vmatpush.msra.mxu0 0.0
  %763 = vmatpush.msra.mxu0 0.0
  %764 = vmatpush.msra.mxu0 0.0
  %765 = vmatpush.msra.mxu0 0.0
  %766 = vmatpush.msra.mxu0 0.0
  %767 = vmatpush.msra.mxu0 0.0
  %768 = vmatpush.msra.mxu0 0.0
  %769 = vmatpush.msra.mxu0 0.0
  %770 = vmatpush.msra.mxu0 0.0
  %771 = vmatpush.msra.mxu0 %v749
  %772 = vmatmul.f32.gmra.mxu0 %v754
  %v773 = vpop.f32.mrf.mxu0
  %v774 = vadd.f32 0.0, %v773
  %775 = vdwg.mxu0
  %776 = vmatpush.msra.mxu0 0.0
  %777 = vmatpush.msra.mxu0 0.0
  %778 = vmatpush.msra.mxu0 0.0
  %779 = vmatpush.msra.mxu0 0.0
  %780 = vmatpush.msra.mxu0 0.0
  %781 = vmatpush.msra.mxu0 0.0
  %782 = vmatpush.msra.mxu0 0.0
  %783 = vmatpush.msra.mxu0 0.0
  %784 = vmatpush.msra.mxu0 0.0
  %785 = vmatpush.msra.mxu0 0.0
  %786 = vmatpush.msra.mxu0 0.0
  %787 = vmatpush.msra.mxu0 0.0
  %788 = vmatpush.msra.mxu0 0.0
  %789 = vmatpush.msra.mxu0 0.0
  %790 = vmatpush.msra.mxu0 0.0
  %791 = vmatpush.msra.mxu0 %v750
  %792 = vmatmul.f32.gmra.mxu0 %v754
  %v793 = vpop.f32.mrf.mxu0
  %v794 = vadd.f32 0.0, %v793
  %795 = vdwg.mxu0
  %v796 = vadd.f32 %v741, %v774
  %v797 = vadd.f32 %v742, %v794
  %s798 = scalar_lea.vmem %s3, 32
  %v799 = vld [vmem:[%s798] sm:$0xff]
  %v801 = vsel %vm61, %v799, 0
  %803 = vmatpush.msra.mxu0 0.0
  %804 = vmatpush.msra.mxu0 0.0
  %805 = vmatpush.msra.mxu0 0.0
  %806 = vmatpush.msra.mxu0 0.0
  %807 = vmatpush.msra.mxu0 0.0
  %808 = vmatpush.msra.mxu0 0.0
  %809 = vmatpush.msra.mxu0 0.0
  %810 = vmatpush.msra.mxu0 0.0
  %811 = vmatpush.msra.mxu0 0.0
  %812 = vmatpush.msra.mxu0 0.0
  %813 = vmatpush.msra.mxu0 0.0
  %814 = vmatpush.msra.mxu0 0.0
  %815 = vmatpush.msra.mxu0 0.0
  %816 = vmatpush.msra.mxu0 0.0
  %817 = vmatpush.msra.mxu0 0.0
  %818 = vmatpush.msra.mxu0 %v581
  %819 = vmatmul.f32.gmra.mxu0 %v801
  %v820 = vpop.f32.mrf.mxu0
  %v821 = vadd.f32 0.0, %v820
  %822 = vdwg.mxu0
  %823 = vmatpush.msra.mxu0 0.0
  %824 = vmatpush.msra.mxu0 0.0
  %825 = vmatpush.msra.mxu0 0.0
  %826 = vmatpush.msra.mxu0 0.0
  %827 = vmatpush.msra.mxu0 0.0
  %828 = vmatpush.msra.mxu0 0.0
  %829 = vmatpush.msra.mxu0 0.0
  %830 = vmatpush.msra.mxu0 0.0
  %831 = vmatpush.msra.mxu0 0.0
  %832 = vmatpush.msra.mxu0 0.0
  %833 = vmatpush.msra.mxu0 0.0
  %834 = vmatpush.msra.mxu0 0.0
  %835 = vmatpush.msra.mxu0 0.0
  %836 = vmatpush.msra.mxu0 0.0
  %837 = vmatpush.msra.mxu0 0.0
  %838 = vmatpush.msra.mxu0 %v582
  %839 = vmatmul.f32.gmra.mxu0 %v801
  %v840 = vpop.f32.mrf.mxu0
  %v841 = vadd.f32 0.0, %v840
  %842 = vdwg.mxu0
  %v843 = vadd.f32 %v796, %v821
  %v844 = vadd.f32 %v797, %v841
  %845 = vrot.lane.b32.xlu0 %v581, 127
  %v846 = vpop.permute.xlu0 %845
  %847 = vrot.lane.b32.xlu0 %v582, 127
  %v848 = vpop.permute.xlu0 %847
  %v849 = vsel %vm325, %v846, %v848
  %v850 = vsel %vm325, %v848, %v846
  %v851 = vmul.f32 %v849, %v331
  %v852 = vmul.f32 %v850, %v332
  %s853 = scalar_lea.vmem %s3, 40
  %v854 = vld [vmem:[%s853] sm:$0xff]
  %v856 = vsel %vm61, %v854, 0
  %858 = vmatpush.msra.mxu0 0.0
  %859 = vmatpush.msra.mxu0 0.0
  %860 = vmatpush.msra.mxu0 0.0
  %861 = vmatpush.msra.mxu0 0.0
  %862 = vmatpush.msra.mxu0 0.0
  %863 = vmatpush.msra.mxu0 0.0
  %864 = vmatpush.msra.mxu0 0.0
  %865 = vmatpush.msra.mxu0 0.0
  %866 = vmatpush.msra.mxu0 0.0
  %867 = vmatpush.msra.mxu0 0.0
  %868 = vmatpush.msra.mxu0 0.0
  %869 = vmatpush.msra.mxu0 0.0
  %870 = vmatpush.msra.mxu0 0.0
  %871 = vmatpush.msra.mxu0 0.0
  %872 = vmatpush.msra.mxu0 0.0
  %873 = vmatpush.msra.mxu0 %v851
  %874 = vmatmul.f32.gmra.mxu0 %v856
  %v875 = vpop.f32.mrf.mxu0
  %v876 = vadd.f32 0.0, %v875
  %877 = vdwg.mxu0
  %878 = vmatpush.msra.mxu0 0.0
  %879 = vmatpush.msra.mxu0 0.0
  %880 = vmatpush.msra.mxu0 0.0
  %881 = vmatpush.msra.mxu0 0.0
  %882 = vmatpush.msra.mxu0 0.0
  %883 = vmatpush.msra.mxu0 0.0
  %884 = vmatpush.msra.mxu0 0.0
  %885 = vmatpush.msra.mxu0 0.0
  %886 = vmatpush.msra.mxu0 0.0
  %887 = vmatpush.msra.mxu0 0.0
  %888 = vmatpush.msra.mxu0 0.0
  %889 = vmatpush.msra.mxu0 0.0
  %890 = vmatpush.msra.mxu0 0.0
  %891 = vmatpush.msra.mxu0 0.0
  %892 = vmatpush.msra.mxu0 0.0
  %893 = vmatpush.msra.mxu0 %v852
  %894 = vmatmul.f32.gmra.mxu0 %v856
  %v895 = vpop.f32.mrf.mxu0
  %v896 = vadd.f32 0.0, %v895
  %897 = vdwg.mxu0
  %v898 = vadd.f32 %v843, %v876
  %v899 = vadd.f32 %v844, %v896
  %900 = vrot.lane.b32.xlu0 %v581, 113
  %v901 = vpop.permute.xlu0 %900
  %902 = vrot.lane.b32.xlu0 %v582, 113
  %v903 = vpop.permute.xlu0 %902
  %v904 = vsel %vm388, %v901, %v903
  %v905 = vsel %vm388, %v903, %v901
  %v906 = vmul.f32 %v904, %v394
  %v907 = vmul.f32 %v905, %v395
  %s908 = scalar_lea.vmem %s3, 48
  %v909 = vld [vmem:[%s908] sm:$0xff]
  %v911 = vsel %vm61, %v909, 0
  %913 = vmatpush.msra.mxu0 0.0
  %914 = vmatpush.msra.mxu0 0.0
  %915 = vmatpush.msra.mxu0 0.0
  %916 = vmatpush.msra.mxu0 0.0
  %917 = vmatpush.msra.mxu0 0.0
  %918 = vmatpush.msra.mxu0 0.0
  %919 = vmatpush.msra.mxu0 0.0
  %920 = vmatpush.msra.mxu0 0.0
  %921 = vmatpush.msra.mxu0 0.0
  %922 = vmatpush.msra.mxu0 0.0
  %923 = vmatpush.msra.mxu0 0.0
  %924 = vmatpush.msra.mxu0 0.0
  %925 = vmatpush.msra.mxu0 0.0
  %926 = vmatpush.msra.mxu0 0.0
  %927 = vmatpush.msra.mxu0 0.0
  %928 = vmatpush.msra.mxu0 %v906
  %929 = vmatmul.f32.gmra.mxu0 %v911
  %v930 = vpop.f32.mrf.mxu0
  %v931 = vadd.f32 0.0, %v930
  %932 = vdwg.mxu0
  %933 = vmatpush.msra.mxu0 0.0
  %934 = vmatpush.msra.mxu0 0.0
  %935 = vmatpush.msra.mxu0 0.0
  %936 = vmatpush.msra.mxu0 0.0
  %937 = vmatpush.msra.mxu0 0.0
  %938 = vmatpush.msra.mxu0 0.0
  %939 = vmatpush.msra.mxu0 0.0
  %940 = vmatpush.msra.mxu0 0.0
  %941 = vmatpush.msra.mxu0 0.0
  %942 = vmatpush.msra.mxu0 0.0
  %943 = vmatpush.msra.mxu0 0.0
  %944 = vmatpush.msra.mxu0 0.0
  %945 = vmatpush.msra.mxu0 0.0
  %946 = vmatpush.msra.mxu0 0.0
  %947 = vmatpush.msra.mxu0 0.0
  %948 = vmatpush.msra.mxu0 %v907
  %949 = vmatmul.f32.gmra.mxu0 %v911
  %v950 = vpop.f32.mrf.mxu0
  %v951 = vadd.f32 0.0, %v950
  %952 = vdwg.mxu0
  %v953 = vadd.f32 %v898, %v931
  %v954 = vadd.f32 %v899, %v951
  %955 = vrot.lane.b32.xlu0 %v581, 112
  %v956 = vpop.permute.xlu0 %955
  %957 = vrot.lane.b32.xlu0 %v582, 112
  %v958 = vpop.permute.xlu0 %957
  %v959 = vsel %vm451, %v956, %v958
  %v960 = vsel %vm451, %v958, %v956
  %v961 = vmul.f32 %v959, %v457
  %v962 = vmul.f32 %v960, %v458
  %s963 = scalar_lea.vmem %s3, 56
  %v964 = vld [vmem:[%s963] sm:$0xff]
  %v966 = vsel %vm61, %v964, 0
  %968 = vmatpush.msra.mxu0 0.0
  %969 = vmatpush.msra.mxu0 0.0
  %970 = vmatpush.msra.mxu0 0.0
  %971 = vmatpush.msra.mxu0 0.0
  %972 = vmatpush.msra.mxu0 0.0
  %973 = vmatpush.msra.mxu0 0.0
  %974 = vmatpush.msra.mxu0 0.0
  %975 = vmatpush.msra.mxu0 0.0
  %976 = vmatpush.msra.mxu0 0.0
  %977 = vmatpush.msra.mxu0 0.0
  %978 = vmatpush.msra.mxu0 0.0
  %979 = vmatpush.msra.mxu0 0.0
  %980 = vmatpush.msra.mxu0 0.0
  %981 = vmatpush.msra.mxu0 0.0
  %982 = vmatpush.msra.mxu0 0.0
  %983 = vmatpush.msra.mxu0 %v961
  %984 = vmatmul.f32.gmra.mxu0 %v966
  %v985 = vpop.f32.mrf.mxu0
  %v986 = vadd.f32 0.0, %v985
  %987 = vdwg.mxu0
  %988 = vmatpush.msra.mxu0 0.0
  %989 = vmatpush.msra.mxu0 0.0
  %990 = vmatpush.msra.mxu0 0.0
  %991 = vmatpush.msra.mxu0 0.0
  %992 = vmatpush.msra.mxu0 0.0
  %993 = vmatpush.msra.mxu0 0.0
  %994 = vmatpush.msra.mxu0 0.0
  %995 = vmatpush.msra.mxu0 0.0
  %996 = vmatpush.msra.mxu0 0.0
  %997 = vmatpush.msra.mxu0 0.0
  %998 = vmatpush.msra.mxu0 0.0
  %999 = vmatpush.msra.mxu0 0.0
  %1000 = vmatpush.msra.mxu0 0.0
  %1001 = vmatpush.msra.mxu0 0.0
  %1002 = vmatpush.msra.mxu0 0.0
  %1003 = vmatpush.msra.mxu0 %v962
  %1004 = vmatmul.f32.gmra.mxu0 %v966
  %v1005 = vpop.f32.mrf.mxu0
  %v1006 = vadd.f32 0.0, %v1005
  %1007 = vdwg.mxu0
  %v1008 = vadd.f32 %v953, %v986
  %v1009 = vadd.f32 %v954, %v1006
  %1010 = vrot.lane.b32.xlu0 %v581, 111
  %v1011 = vpop.permute.xlu0 %1010
  %1012 = vrot.lane.b32.xlu0 %v582, 111
  %v1013 = vpop.permute.xlu0 %1012
  %v1014 = vsel %vm514, %v1011, %v1013
  %v1015 = vsel %vm514, %v1013, %v1011
  %v1016 = vmul.f32 %v1014, %v520
  %v1017 = vmul.f32 %v1015, %v521
  %s1018 = scalar_lea.vmem %s3, 64
  %v1019 = vld [vmem:[%s1018] sm:$0xff]
  %v1021 = vsel %vm61, %v1019, 0
  %1023 = vmatpush.msra.mxu0 0.0
  %1024 = vmatpush.msra.mxu0 0.0
  %1025 = vmatpush.msra.mxu0 0.0
  %1026 = vmatpush.msra.mxu0 0.0
  %1027 = vmatpush.msra.mxu0 0.0
  %1028 = vmatpush.msra.mxu0 0.0
  %1029 = vmatpush.msra.mxu0 0.0
  %1030 = vmatpush.msra.mxu0 0.0
  %1031 = vmatpush.msra.mxu0 0.0
  %1032 = vmatpush.msra.mxu0 0.0
  %1033 = vmatpush.msra.mxu0 0.0
  %1034 = vmatpush.msra.mxu0 0.0
  %1035 = vmatpush.msra.mxu0 0.0
  %1036 = vmatpush.msra.mxu0 0.0
  %1037 = vmatpush.msra.mxu0 0.0
  %1038 = vmatpush.msra.mxu0 %v1016
  %1039 = vmatmul.f32.gmra.mxu0 %v1021
  %v1040 = vpop.f32.mrf.mxu0
  %v1041 = vadd.f32 0.0, %v1040
  %1042 = vdwg.mxu0
  %1043 = vmatpush.msra.mxu0 0.0
  %1044 = vmatpush.msra.mxu0 0.0
  %1045 = vmatpush.msra.mxu0 0.0
  %1046 = vmatpush.msra.mxu0 0.0
  %1047 = vmatpush.msra.mxu0 0.0
  %1048 = vmatpush.msra.mxu0 0.0
  %1049 = vmatpush.msra.mxu0 0.0
  %1050 = vmatpush.msra.mxu0 0.0
  %1051 = vmatpush.msra.mxu0 0.0
  %1052 = vmatpush.msra.mxu0 0.0
  %1053 = vmatpush.msra.mxu0 0.0
  %1054 = vmatpush.msra.mxu0 0.0
  %1055 = vmatpush.msra.mxu0 0.0
  %1056 = vmatpush.msra.mxu0 0.0
  %1057 = vmatpush.msra.mxu0 0.0
  %1058 = vmatpush.msra.mxu0 %v1017
  %1059 = vmatmul.f32.gmra.mxu0 %v1021
  %v1060 = vpop.f32.mrf.mxu0
  %v1061 = vadd.f32 0.0, %v1060
  %1062 = vdwg.mxu0
  %v1063 = vadd.f32 %v1008, %v1041
  %v1064 = vadd.f32 %v1009, %v1061
  %v1065 = vld [vmem:[%s4] sm:$0xff]
  %1067 = vset.pattern.permute.xlu0 0
  %1068 = vperm.xlu0 %1067, %v1065
  %v1069 = vpop.permute.xlu0 %1068
  %v1071 = vadd.f32 %v1063, %v1069
  %v1072 = vadd.f32 %v1064, %v1069
  %v1073 = vadd.f32 %v1071, %v23
  %v1074 = vadd.f32 %v1072, %v24
  %v1075 = vmax.f32 %v1073, 0.0
  %v1076 = vmax.f32 %v1074, 0.0
  %1077 = vst [vmem:[%s6] sm:$0xff] %v1075
  %1078 = vst [vmem:[%s6 + $0x8] sm:$0xff] %v1076
  %s1079 = scalar_lea.vmem %s0, 16
  %v1080 = vld [vmem:[%s1079] sm:$0xff]
  %v1081 = vld [vmem:[%s1079 + $0x8] sm:$0xff]
  %1082 = vrot.lane.b32.xlu0 %v1080, 17
  %v1083 = vpop.permute.xlu0 %1082
  %1084 = vrot.lane.b32.xlu0 %v1081, 17
  %v1085 = vpop.permute.xlu0 %1084
  %v1086 = vsel %vm31, %v1083, %v1085
  %v1087 = vsel %vm31, %v1085, %v1083
  %v1088 = vld [vmem:[%s5] sm:$0x3]
  %v1090 = vperm.slane %v1088, 0
  %v1091 = vperm.slane %v1088, 1
  %v1094 = vmul.f32 %v1087, %v1090
  %v1095 = vmul.f32 %v1086, %v1091
  %v1096 = vld [vmem:[%s1] sm:$0xff]
  %1097 = vrot.lane.b32.xlu0 %v1080, 16
  %v1098 = vpop.permute.xlu0 %1097
  %1099 = vrot.lane.b32.xlu0 %v1081, 16
  %v1100 = vpop.permute.xlu0 %1099
  %v1101 = vsel %vm47, %v1098, %v1100
  %v1102 = vsel %vm47, %v1100, %v1098
  %v1103 = vld [vmem:[%s50] sm:$0x3]
  %v1105 = vperm.slane %v1103, 0
  %v1106 = vperm.slane %v1103, 1
  %v1109 = vmul.f32 %v1102, %v1105
  %v1110 = vmul.f32 %v1101, %v1106
  %v1111 = vld [vmem:[%s59] sm:$0xff]
  %v1113 = vsel %vm61, %v1111, 0
  %1115 = vmatpush.msra.mxu0 0.0
  %1116 = vmatpush.msra.mxu0 0.0
  %1117 = vmatpush.msra.mxu0 0.0
  %1118 = vmatpush.msra.mxu0 0.0
  %1119 = vmatpush.msra.mxu0 0.0
  %1120 = vmatpush.msra.mxu0 0.0
  %1121 = vmatpush.msra.mxu0 0.0
  %1122 = vmatpush.msra.mxu0 0.0
  %1123 = vmatpush.msra.mxu0 0.0
  %1124 = vmatpush.msra.mxu0 0.0
  %1125 = vmatpush.msra.mxu0 0.0
  %1126 = vmatpush.msra.mxu0 0.0
  %1127 = vmatpush.msra.mxu0 0.0
  %1128 = vmatpush.msra.mxu0 0.0
  %1129 = vmatpush.msra.mxu0 0.0
  %1130 = vmatpush.msra.mxu0 %v1109
  %1131 = vmatmul.f32.gmra.mxu0 %v1113
  %v1132 = vpop.f32.mrf.mxu0
  %v1133 = vadd.f32 0.0, %v1132
  %1134 = vdwg.mxu0
  %1135 = vmatpush.msra.mxu0 0.0
  %1136 = vmatpush.msra.mxu0 0.0
  %1137 = vmatpush.msra.mxu0 0.0
  %1138 = vmatpush.msra.mxu0 0.0
  %1139 = vmatpush.msra.mxu0 0.0
  %1140 = vmatpush.msra.mxu0 0.0
  %1141 = vmatpush.msra.mxu0 0.0
  %1142 = vmatpush.msra.mxu0 0.0
  %1143 = vmatpush.msra.mxu0 0.0
  %1144 = vmatpush.msra.mxu0 0.0
  %1145 = vmatpush.msra.mxu0 0.0
  %1146 = vmatpush.msra.mxu0 0.0
  %1147 = vmatpush.msra.mxu0 0.0
  %1148 = vmatpush.msra.mxu0 0.0
  %1149 = vmatpush.msra.mxu0 0.0
  %1150 = vmatpush.msra.mxu0 %v1110
  %1151 = vmatmul.f32.gmra.mxu0 %v1113
  %v1152 = vpop.f32.mrf.mxu0
  %v1153 = vadd.f32 0.0, %v1152
  %1154 = vdwg.mxu0
  %v1156 = vsel %vm61, %v1096, 0
  %1158 = vmatpush.msra.mxu0 0.0
  %1159 = vmatpush.msra.mxu0 0.0
  %1160 = vmatpush.msra.mxu0 0.0
  %1161 = vmatpush.msra.mxu0 0.0
  %1162 = vmatpush.msra.mxu0 0.0
  %1163 = vmatpush.msra.mxu0 0.0
  %1164 = vmatpush.msra.mxu0 0.0
  %1165 = vmatpush.msra.mxu0 0.0
  %1166 = vmatpush.msra.mxu0 0.0
  %1167 = vmatpush.msra.mxu0 0.0
  %1168 = vmatpush.msra.mxu0 0.0
  %1169 = vmatpush.msra.mxu0 0.0
  %1170 = vmatpush.msra.mxu0 0.0
  %1171 = vmatpush.msra.mxu0 0.0
  %1172 = vmatpush.msra.mxu0 0.0
  %1173 = vmatpush.msra.mxu0 %v1094
  %1174 = vmatmul.f32.gmra.mxu0 %v1156
  %v1175 = vpop.f32.mrf.mxu0
  %v1176 = vadd.f32 %v1133, %v1175
  %1177 = vdwg.mxu0
  %1178 = vmatpush.msra.mxu0 0.0
  %1179 = vmatpush.msra.mxu0 0.0
  %1180 = vmatpush.msra.mxu0 0.0
  %1181 = vmatpush.msra.mxu0 0.0
  %1182 = vmatpush.msra.mxu0 0.0
  %1183 = vmatpush.msra.mxu0 0.0
  %1184 = vmatpush.msra.mxu0 0.0
  %1185 = vmatpush.msra.mxu0 0.0
  %1186 = vmatpush.msra.mxu0 0.0
  %1187 = vmatpush.msra.mxu0 0.0
  %1188 = vmatpush.msra.mxu0 0.0
  %1189 = vmatpush.msra.mxu0 0.0
  %1190 = vmatpush.msra.mxu0 0.0
  %1191 = vmatpush.msra.mxu0 0.0
  %1192 = vmatpush.msra.mxu0 0.0
  %1193 = vmatpush.msra.mxu0 %v1095
  %1194 = vmatmul.f32.gmra.mxu0 %v1156
  %v1195 = vpop.f32.mrf.mxu0
  %v1196 = vadd.f32 %v1153, %v1195
  %1197 = vdwg.mxu0
  %1198 = vrot.lane.b32.xlu0 %v1080, 15
  %v1199 = vpop.permute.xlu0 %1198
  %1200 = vrot.lane.b32.xlu0 %v1081, 15
  %v1201 = vpop.permute.xlu0 %1200
  %v1202 = vsel %vm152, %v1199, %v1201
  %v1203 = vsel %vm152, %v1201, %v1199
  %v1204 = vld [vmem:[%s155] sm:$0x3]
  %v1206 = vperm.slane %v1204, 0
  %v1207 = vperm.slane %v1204, 1
  %v1210 = vmul.f32 %v1203, %v1206
  %v1211 = vmul.f32 %v1202, %v1207
  %v1212 = vld [vmem:[%s164] sm:$0xff]
  %v1214 = vsel %vm61, %v1212, 0
  %1216 = vmatpush.msra.mxu0 0.0
  %1217 = vmatpush.msra.mxu0 0.0
  %1218 = vmatpush.msra.mxu0 0.0
  %1219 = vmatpush.msra.mxu0 0.0
  %1220 = vmatpush.msra.mxu0 0.0
  %1221 = vmatpush.msra.mxu0 0.0
  %1222 = vmatpush.msra.mxu0 0.0
  %1223 = vmatpush.msra.mxu0 0.0
  %1224 = vmatpush.msra.mxu0 0.0
  %1225 = vmatpush.msra.mxu0 0.0
  %1226 = vmatpush.msra.mxu0 0.0
  %1227 = vmatpush.msra.mxu0 0.0
  %1228 = vmatpush.msra.mxu0 0.0
  %1229 = vmatpush.msra.mxu0 0.0
  %1230 = vmatpush.msra.mxu0 0.0
  %1231 = vmatpush.msra.mxu0 %v1210
  %1232 = vmatmul.f32.gmra.mxu0 %v1214
  %v1233 = vpop.f32.mrf.mxu0
  %v1234 = vadd.f32 0.0, %v1233
  %1235 = vdwg.mxu0
  %1236 = vmatpush.msra.mxu0 0.0
  %1237 = vmatpush.msra.mxu0 0.0
  %1238 = vmatpush.msra.mxu0 0.0
  %1239 = vmatpush.msra.mxu0 0.0
  %1240 = vmatpush.msra.mxu0 0.0
  %1241 = vmatpush.msra.mxu0 0.0
  %1242 = vmatpush.msra.mxu0 0.0
  %1243 = vmatpush.msra.mxu0 0.0
  %1244 = vmatpush.msra.mxu0 0.0
  %1245 = vmatpush.msra.mxu0 0.0
  %1246 = vmatpush.msra.mxu0 0.0
  %1247 = vmatpush.msra.mxu0 0.0
  %1248 = vmatpush.msra.mxu0 0.0
  %1249 = vmatpush.msra.mxu0 0.0
  %1250 = vmatpush.msra.mxu0 0.0
  %1251 = vmatpush.msra.mxu0 %v1211
  %1252 = vmatmul.f32.gmra.mxu0 %v1214
  %v1253 = vpop.f32.mrf.mxu0
  %v1254 = vadd.f32 0.0, %v1253
  %1255 = vdwg.mxu0
  %v1256 = vadd.f32 %v1176, %v1234
  %v1257 = vadd.f32 %v1196, %v1254
  %1258 = vrot.lane.b32.xlu0 %v1080, 1
  %v1259 = vpop.permute.xlu0 %1258
  %1260 = vrot.lane.b32.xlu0 %v1081, 1
  %v1261 = vpop.permute.xlu0 %1260
  %v1262 = vsel %vm215, %v1259, %v1261
  %v1263 = vsel %vm215, %v1261, %v1259
  %v1264 = vld [vmem:[%s218] sm:$0x3]
  %v1266 = vperm.slane %v1264, 0
  %v1267 = vperm.slane %v1264, 1
  %v1270 = vmul.f32 %v1263, %v1266
  %v1271 = vmul.f32 %v1262, %v1267
  %v1272 = vld [vmem:[%s227] sm:$0xff]
  %v1274 = vsel %vm61, %v1272, 0
  %1276 = vmatpush.msra.mxu0 0.0
  %1277 = vmatpush.msra.mxu0 0.0
  %1278 = vmatpush.msra.mxu0 0.0
  %1279 = vmatpush.msra.mxu0 0.0
  %1280 = vmatpush.msra.mxu0 0.0
  %1281 = vmatpush.msra.mxu0 0.0
  %1282 = vmatpush.msra.mxu0 0.0
  %1283 = vmatpush.msra.mxu0 0.0
  %1284 = vmatpush.msra.mxu0 0.0
  %1285 = vmatpush.msra.mxu0 0.0
  %1286 = vmatpush.msra.mxu0 0.0
  %1287 = vmatpush.msra.mxu0 0.0
  %1288 = vmatpush.msra.mxu0 0.0
  %1289 = vmatpush.msra.mxu0 0.0
  %1290 = vmatpush.msra.mxu0 0.0
  %1291 = vmatpush.msra.mxu0 %v1270
  %1292 = vmatmul.f32.gmra.mxu0 %v1274
  %v1293 = vpop.f32.mrf.mxu0
  %v1294 = vadd.f32 0.0, %v1293
  %1295 = vdwg.mxu0
  %1296 = vmatpush.msra.mxu0 0.0
  %1297 = vmatpush.msra.mxu0 0.0
  %1298 = vmatpush.msra.mxu0 0.0
  %1299 = vmatpush.msra.mxu0 0.0
  %1300 = vmatpush.msra.mxu0 0.0
  %1301 = vmatpush.msra.mxu0 0.0
  %1302 = vmatpush.msra.mxu0 0.0
  %1303 = vmatpush.msra.mxu0 0.0
  %1304 = vmatpush.msra.mxu0 0.0
  %1305 = vmatpush.msra.mxu0 0.0
  %1306 = vmatpush.msra.mxu0 0.0
  %1307 = vmatpush.msra.mxu0 0.0
  %1308 = vmatpush.msra.mxu0 0.0
  %1309 = vmatpush.msra.mxu0 0.0
  %1310 = vmatpush.msra.mxu0 0.0
  %1311 = vmatpush.msra.mxu0 %v1271
  %1312 = vmatmul.f32.gmra.mxu0 %v1274
  %v1313 = vpop.f32.mrf.mxu0
  %v1314 = vadd.f32 0.0, %v1313
  %1315 = vdwg.mxu0
  %v1316 = vadd.f32 %v1256, %v1294
  %v1317 = vadd.f32 %v1257, %v1314
  %v1318 = vld [vmem:[%s274] sm:$0xff]
  %v1320 = vsel %vm61, %v1318, 0
  %1322 = vmatpush.msra.mxu0 0.0
  %1323 = vmatpush.msra.mxu0 0.0
  %1324 = vmatpush.msra.mxu0 0.0
  %1325 = vmatpush.msra.mxu0 0.0
  %1326 = vmatpush.msra.mxu0 0.0
  %1327 = vmatpush.msra.mxu0 0.0
  %1328 = vmatpush.msra.mxu0 0.0
  %1329 = vmatpush.msra.mxu0 0.0
  %1330 = vmatpush.msra.mxu0 0.0
  %1331 = vmatpush.msra.mxu0 0.0
  %1332 = vmatpush.msra.mxu0 0.0
  %1333 = vmatpush.msra.mxu0 0.0
  %1334 = vmatpush.msra.mxu0 0.0
  %1335 = vmatpush.msra.mxu0 0.0
  %1336 = vmatpush.msra.mxu0 0.0
  %1337 = vmatpush.msra.mxu0 %v1080
  %1338 = vmatmul.f32.gmra.mxu0 %v1320
  %v1339 = vpop.f32.mrf.mxu0
  %v1340 = vadd.f32 0.0, %v1339
  %1341 = vdwg.mxu0
  %1342 = vmatpush.msra.mxu0 0.0
  %1343 = vmatpush.msra.mxu0 0.0
  %1344 = vmatpush.msra.mxu0 0.0
  %1345 = vmatpush.msra.mxu0 0.0
  %1346 = vmatpush.msra.mxu0 0.0
  %1347 = vmatpush.msra.mxu0 0.0
  %1348 = vmatpush.msra.mxu0 0.0
  %1349 = vmatpush.msra.mxu0 0.0
  %1350 = vmatpush.msra.mxu0 0.0
  %1351 = vmatpush.msra.mxu0 0.0
  %1352 = vmatpush.msra.mxu0 0.0
  %1353 = vmatpush.msra.mxu0 0.0
  %1354 = vmatpush.msra.mxu0 0.0
  %1355 = vmatpush.msra.mxu0 0.0
  %1356 = vmatpush.msra.mxu0 0.0
  %1357 = vmatpush.msra.mxu0 %v1081
  %1358 = vmatmul.f32.gmra.mxu0 %v1320
  %v1359 = vpop.f32.mrf.mxu0
  %v1360 = vadd.f32 0.0, %v1359
  %1361 = vdwg.mxu0
  %v1362 = vadd.f32 %v1316, %v1340
  %v1363 = vadd.f32 %v1317, %v1360
  %1364 = vrot.lane.b32.xlu0 %v1080, 127
  %v1365 = vpop.permute.xlu0 %1364
  %1366 = vrot.lane.b32.xlu0 %v1081, 127
  %v1367 = vpop.permute.xlu0 %1366
  %v1368 = vsel %vm325, %v1365, %v1367
  %v1369 = vsel %vm325, %v1367, %v1365
  %v1370 = vld [vmem:[%s328] sm:$0x3]
  %v1372 = vperm.slane %v1370, 0
  %v1373 = vperm.slane %v1370, 1
  %v1376 = vmul.f32 %v1368, %v1372
  %v1377 = vmul.f32 %v1369, %v1373
  %v1378 = vld [vmem:[%s337] sm:$0xff]
  %v1380 = vsel %vm61, %v1378, 0
  %1382 = vmatpush.msra.mxu0 0.0
  %1383 = vmatpush.msra.mxu0 0.0
  %1384 = vmatpush.msra.mxu0 0.0
  %1385 = vmatpush.msra.mxu0 0.0
  %1386 = vmatpush.msra.mxu0 0.0
  %1387 = vmatpush.msra.mxu0 0.0
  %1388 = vmatpush.msra.mxu0 0.0
  %1389 = vmatpush.msra.mxu0 0.0
  %1390 = vmatpush.msra.mxu0 0.0
  %1391 = vmatpush.msra.mxu0 0.0
  %1392 = vmatpush.msra.mxu0 0.0
  %1393 = vmatpush.msra.mxu0 0.0
  %1394 = vmatpush.msra.mxu0 0.0
  %1395 = vmatpush.msra.mxu0 0.0
  %1396 = vmatpush.msra.mxu0 0.0
  %1397 = vmatpush.msra.mxu0 %v1376
  %1398 = vmatmul.f32.gmra.mxu0 %v1380
  %v1399 = vpop.f32.mrf.mxu0
  %v1400 = vadd.f32 0.0, %v1399
  %1401 = vdwg.mxu0
  %1402 = vmatpush.msra.mxu0 0.0
  %1403 = vmatpush.msra.mxu0 0.0
  %1404 = vmatpush.msra.mxu0 0.0
  %1405 = vmatpush.msra.mxu0 0.0
  %1406 = vmatpush.msra.mxu0 0.0
  %1407 = vmatpush.msra.mxu0 0.0
  %1408 = vmatpush.msra.mxu0 0.0
  %1409 = vmatpush.msra.mxu0 0.0
  %1410 = vmatpush.msra.mxu0 0.0
  %1411 = vmatpush.msra.mxu0 0.0
  %1412 = vmatpush.msra.mxu0 0.0
  %1413 = vmatpush.msra.mxu0 0.0
  %1414 = vmatpush.msra.mxu0 0.0
  %1415 = vmatpush.msra.mxu0 0.0
  %1416 = vmatpush.msra.mxu0 0.0
  %1417 = vmatpush.msra.mxu0 %v1377
  %1418 = vmatmul.f32.gmra.mxu0 %v1380
  %v1419 = vpop.f32.mrf.mxu0
  %v1420 = vadd.f32 0.0, %v1419
  %1421 = vdwg.mxu0
  %v1422 = vadd.f32 %v1362, %v1400
  %v1423 = vadd.f32 %v1363, %v1420
  %1424 = vrot.lane.b32.xlu0 %v1080, 113
  %v1425 = vpop.permute.xlu0 %1424
  %1426 = vrot.lane.b32.xlu0 %v1081, 113
  %v1427 = vpop.permute.xlu0 %1426
  %v1428 = vsel %vm388, %v1425, %v1427
  %v1429 = vsel %vm388, %v1427, %v1425
  %v1430 = vld [vmem:[%s391] sm:$0x3]
  %v1432 = vperm.slane %v1430, 0
  %v1433 = vperm.slane %v1430, 1
  %v1436 = vmul.f32 %v1428, %v1432
  %v1437 = vmul.f32 %v1429, %v1433
  %v1438 = vld [vmem:[%s400] sm:$0xff]
  %v1440 = vsel %vm61, %v1438, 0
  %1442 = vmatpush.msra.mxu0 0.0
  %1443 = vmatpush.msra.mxu0 0.0
  %1444 = vmatpush.msra.mxu0 0.0
  %1445 = vmatpush.msra.mxu0 0.0
  %1446 = vmatpush.msra.mxu0 0.0
  %1447 = vmatpush.msra.mxu0 0.0
  %1448 = vmatpush.msra.mxu0 0.0
  %1449 = vmatpush.msra.mxu0 0.0
  %1450 = vmatpush.msra.mxu0 0.0
  %1451 = vmatpush.msra.mxu0 0.0
  %1452 = vmatpush.msra.mxu0 0.0
  %1453 = vmatpush.msra.mxu0 0.0
  %1454 = vmatpush.msra.mxu0 0.0
  %1455 = vmatpush.msra.mxu0 0.0
  %1456 = vmatpush.msra.mxu0 0.0
  %1457 = vmatpush.msra.mxu0 %v1436
  %1458 = vmatmul.f32.gmra.mxu0 %v1440
  %v1459 = vpop.f32.mrf.mxu0
  %v1460 = vadd.f32 0.0, %v1459
  %1461 = vdwg.mxu0
  %1462 = vmatpush.msra.mxu0 0.0
  %1463 = vmatpush.msra.mxu0 0.0
  %1464 = vmatpush.msra.mxu0 0.0
  %1465 = vmatpush.msra.mxu0 0.0
  %1466 = vmatpush.msra.mxu0 0.0
  %1467 = vmatpush.msra.mxu0 0.0
  %1468 = vmatpush.msra.mxu0 0.0
  %1469 = vmatpush.msra.mxu0 0.0
  %1470 = vmatpush.msra.mxu0 0.0
  %1471 = vmatpush.msra.mxu0 0.0
  %1472 = vmatpush.msra.mxu0 0.0
  %1473 = vmatpush.msra.mxu0 0.0
  %1474 = vmatpush.msra.mxu0 0.0
  %1475 = vmatpush.msra.mxu0 0.0
  %1476 = vmatpush.msra.mxu0 0.0
  %1477 = vmatpush.msra.mxu0 %v1437
  %1478 = vmatmul.f32.gmra.mxu0 %v1440
  %v1479 = vpop.f32.mrf.mxu0
  %v1480 = vadd.f32 0.0, %v1479
  %1481 = vdwg.mxu0
  %v1482 = vadd.f32 %v1422, %v1460
  %v1483 = vadd.f32 %v1423, %v1480
  %1484 = vrot.lane.b32.xlu0 %v1080, 112
  %v1485 = vpop.permute.xlu0 %1484
  %1486 = vrot.lane.b32.xlu0 %v1081, 112
  %v1487 = vpop.permute.xlu0 %1486
  %v1488 = vsel %vm451, %v1485, %v1487
  %v1489 = vsel %vm451, %v1487, %v1485
  %v1490 = vld [vmem:[%s454] sm:$0x3]
  %v1492 = vperm.slane %v1490, 0
  %v1493 = vperm.slane %v1490, 1
  %v1496 = vmul.f32 %v1488, %v1492
  %v1497 = vmul.f32 %v1489, %v1493
  %v1498 = vld [vmem:[%s463] sm:$0xff]
  %v1500 = vsel %vm61, %v1498, 0
  %1502 = vmatpush.msra.mxu0 0.0
  %1503 = vmatpush.msra.mxu0 0.0
  %1504 = vmatpush.msra.mxu0 0.0
  %1505 = vmatpush.msra.mxu0 0.0
  %1506 = vmatpush.msra.mxu0 0.0
  %1507 = vmatpush.msra.mxu0 0.0
  %1508 = vmatpush.msra.mxu0 0.0
  %1509 = vmatpush.msra.mxu0 0.0
  %1510 = vmatpush.msra.mxu0 0.0
  %1511 = vmatpush.msra.mxu0 0.0
  %1512 = vmatpush.msra.mxu0 0.0
  %1513 = vmatpush.msra.mxu0 0.0
  %1514 = vmatpush.msra.mxu0 0.0
  %1515 = vmatpush.msra.mxu0 0.0
  %1516 = vmatpush.msra.mxu0 0.0
  %1517 = vmatpush.msra.mxu0 %v1496
  %1518 = vmatmul.f32.gmra.mxu0 %v1500
  %v1519 = vpop.f32.mrf.mxu0
  %v1520 = vadd.f32 0.0, %v1519
  %1521 = vdwg.mxu0
  %1522 = vmatpush.msra.mxu0 0.0
  %1523 = vmatpush.msra.mxu0 0.0
  %1524 = vmatpush.msra.mxu0 0.0
  %1525 = vmatpush.msra.mxu0 0.0
  %1526 = vmatpush.msra.mxu0 0.0
  %1527 = vmatpush.msra.mxu0 0.0
  %1528 = vmatpush.msra.mxu0 0.0
  %1529 = vmatpush.msra.mxu0 0.0
  %1530 = vmatpush.msra.mxu0 0.0
  %1531 = vmatpush.msra.mxu0 0.0
  %1532 = vmatpush.msra.mxu0 0.0
  %1533 = vmatpush.msra.mxu0 0.0
  %1534 = vmatpush.msra.mxu0 0.0
  %1535 = vmatpush.msra.mxu0 0.0
  %1536 = vmatpush.msra.mxu0 0.0
  %1537 = vmatpush.msra.mxu0 %v1497
  %1538 = vmatmul.f32.gmra.mxu0 %v1500
  %v1539 = vpop.f32.mrf.mxu0
  %v1540 = vadd.f32 0.0, %v1539
  %1541 = vdwg.mxu0
  %v1542 = vadd.f32 %v1482, %v1520
  %v1543 = vadd.f32 %v1483, %v1540
  %1544 = vrot.lane.b32.xlu0 %v1080, 111
  %v1545 = vpop.permute.xlu0 %1544
  %1546 = vrot.lane.b32.xlu0 %v1081, 111
  %v1547 = vpop.permute.xlu0 %1546
  %v1548 = vsel %vm514, %v1545, %v1547
  %v1549 = vsel %vm514, %v1547, %v1545
  %v1550 = vld [vmem:[%s517] sm:$0x3]
  %v1552 = vperm.slane %v1550, 0
  %v1553 = vperm.slane %v1550, 1
  %v1556 = vmul.f32 %v1548, %v1552
  %v1557 = vmul.f32 %v1549, %v1553
  %v1558 = vld [vmem:[%s526] sm:$0xff]
  %v1560 = vsel %vm61, %v1558, 0
  %1562 = vmatpush.msra.mxu0 0.0
  %1563 = vmatpush.msra.mxu0 0.0
  %1564 = vmatpush.msra.mxu0 0.0
  %1565 = vmatpush.msra.mxu0 0.0
  %1566 = vmatpush.msra.mxu0 0.0
  %1567 = vmatpush.msra.mxu0 0.0
  %1568 = vmatpush.msra.mxu0 0.0
  %1569 = vmatpush.msra.mxu0 0.0
  %1570 = vmatpush.msra.mxu0 0.0
  %1571 = vmatpush.msra.mxu0 0.0
  %1572 = vmatpush.msra.mxu0 0.0
  %1573 = vmatpush.msra.mxu0 0.0
  %1574 = vmatpush.msra.mxu0 0.0
  %1575 = vmatpush.msra.mxu0 0.0
  %1576 = vmatpush.msra.mxu0 0.0
  %1577 = vmatpush.msra.mxu0 %v1556
  %1578 = vmatmul.f32.gmra.mxu0 %v1560
  %v1579 = vpop.f32.mrf.mxu0
  %v1580 = vadd.f32 0.0, %v1579
  %1581 = vdwg.mxu0
  %1582 = vmatpush.msra.mxu0 0.0
  %1583 = vmatpush.msra.mxu0 0.0
  %1584 = vmatpush.msra.mxu0 0.0
  %1585 = vmatpush.msra.mxu0 0.0
  %1586 = vmatpush.msra.mxu0 0.0
  %1587 = vmatpush.msra.mxu0 0.0
  %1588 = vmatpush.msra.mxu0 0.0
  %1589 = vmatpush.msra.mxu0 0.0
  %1590 = vmatpush.msra.mxu0 0.0
  %1591 = vmatpush.msra.mxu0 0.0
  %1592 = vmatpush.msra.mxu0 0.0
  %1593 = vmatpush.msra.mxu0 0.0
  %1594 = vmatpush.msra.mxu0 0.0
  %1595 = vmatpush.msra.mxu0 0.0
  %1596 = vmatpush.msra.mxu0 0.0
  %1597 = vmatpush.msra.mxu0 %v1557
  %1598 = vmatmul.f32.gmra.mxu0 %v1560
  %v1599 = vpop.f32.mrf.mxu0
  %v1600 = vadd.f32 0.0, %v1599
  %1601 = vdwg.mxu0
  %v1602 = vadd.f32 %v1542, %v1580
  %v1603 = vadd.f32 %v1543, %v1600
  %v1604 = vld [vmem:[%s2] sm:$0xff]
  %1606 = vset.pattern.permute.xlu0 0
  %1607 = vperm.xlu0 %1606, %v1604
  %v1608 = vpop.permute.xlu0 %1607
  %v1610 = vadd.f32 %v1602, %v1608
  %v1611 = vadd.f32 %v1603, %v1608
  %v1612 = vmax.f32 %v1610, 0.0
  %v1613 = vmax.f32 %v1611, 0.0
  %1614 = vrot.lane.b32.xlu0 %v1612, 17
  %v1615 = vpop.permute.xlu0 %1614
  %1616 = vrot.lane.b32.xlu0 %v1613, 17
  %v1617 = vpop.permute.xlu0 %1616
  %v1618 = vsel %vm31, %v1615, %v1617
  %v1619 = vsel %vm31, %v1617, %v1615
  %v1620 = vmul.f32 %v1619, %v1090
  %v1621 = vmul.f32 %v1618, %v1091
  %v1622 = vld [vmem:[%s3] sm:$0xff]
  %1623 = vrot.lane.b32.xlu0 %v1612, 16
  %v1624 = vpop.permute.xlu0 %1623
  %1625 = vrot.lane.b32.xlu0 %v1613, 16
  %v1626 = vpop.permute.xlu0 %1625
  %v1627 = vsel %vm47, %v1624, %v1626
  %v1628 = vsel %vm47, %v1626, %v1624
  %v1629 = vmul.f32 %v1628, %v1105
  %v1630 = vmul.f32 %v1627, %v1106
  %v1631 = vld [vmem:[%s600] sm:$0xff]
  %v1633 = vsel %vm61, %v1631, 0
  %1635 = vmatpush.msra.mxu0 0.0
  %1636 = vmatpush.msra.mxu0 0.0
  %1637 = vmatpush.msra.mxu0 0.0
  %1638 = vmatpush.msra.mxu0 0.0
  %1639 = vmatpush.msra.mxu0 0.0
  %1640 = vmatpush.msra.mxu0 0.0
  %1641 = vmatpush.msra.mxu0 0.0
  %1642 = vmatpush.msra.mxu0 0.0
  %1643 = vmatpush.msra.mxu0 0.0
  %1644 = vmatpush.msra.mxu0 0.0
  %1645 = vmatpush.msra.mxu0 0.0
  %1646 = vmatpush.msra.mxu0 0.0
  %1647 = vmatpush.msra.mxu0 0.0
  %1648 = vmatpush.msra.mxu0 0.0
  %1649 = vmatpush.msra.mxu0 0.0
  %1650 = vmatpush.msra.mxu0 %v1629
  %1651 = vmatmul.f32.gmra.mxu0 %v1633
  %v1652 = vpop.f32.mrf.mxu0
  %v1653 = vadd.f32 0.0, %v1652
  %1654 = vdwg.mxu0
  %1655 = vmatpush.msra.mxu0 0.0
  %1656 = vmatpush.msra.mxu0 0.0
  %1657 = vmatpush.msra.mxu0 0.0
  %1658 = vmatpush.msra.mxu0 0.0
  %1659 = vmatpush.msra.mxu0 0.0
  %1660 = vmatpush.msra.mxu0 0.0
  %1661 = vmatpush.msra.mxu0 0.0
  %1662 = vmatpush.msra.mxu0 0.0
  %1663 = vmatpush.msra.mxu0 0.0
  %1664 = vmatpush.msra.mxu0 0.0
  %1665 = vmatpush.msra.mxu0 0.0
  %1666 = vmatpush.msra.mxu0 0.0
  %1667 = vmatpush.msra.mxu0 0.0
  %1668 = vmatpush.msra.mxu0 0.0
  %1669 = vmatpush.msra.mxu0 0.0
  %1670 = vmatpush.msra.mxu0 %v1630
  %1671 = vmatmul.f32.gmra.mxu0 %v1633
  %v1672 = vpop.f32.mrf.mxu0
  %v1673 = vadd.f32 0.0, %v1672
  %1674 = vdwg.mxu0
  %v1676 = vsel %vm61, %v1622, 0
  %1678 = vmatpush.msra.mxu0 0.0
  %1679 = vmatpush.msra.mxu0 0.0
  %1680 = vmatpush.msra.mxu0 0.0
  %1681 = vmatpush.msra.mxu0 0.0
  %1682 = vmatpush.msra.mxu0 0.0
  %1683 = vmatpush.msra.mxu0 0.0
  %1684 = vmatpush.msra.mxu0 0.0
  %1685 = vmatpush.msra.mxu0 0.0
  %1686 = vmatpush.msra.mxu0 0.0
  %1687 = vmatpush.msra.mxu0 0.0
  %1688 = vmatpush.msra.mxu0 0.0
  %1689 = vmatpush.msra.mxu0 0.0
  %1690 = vmatpush.msra.mxu0 0.0
  %1691 = vmatpush.msra.mxu0 0.0
  %1692 = vmatpush.msra.mxu0 0.0
  %1693 = vmatpush.msra.mxu0 %v1620
  %1694 = vmatmul.f32.gmra.mxu0 %v1676
  %v1695 = vpop.f32.mrf.mxu0
  %v1696 = vadd.f32 %v1653, %v1695
  %1697 = vdwg.mxu0
  %1698 = vmatpush.msra.mxu0 0.0
  %1699 = vmatpush.msra.mxu0 0.0
  %1700 = vmatpush.msra.mxu0 0.0
  %1701 = vmatpush.msra.mxu0 0.0
  %1702 = vmatpush.msra.mxu0 0.0
  %1703 = vmatpush.msra.mxu0 0.0
  %1704 = vmatpush.msra.mxu0 0.0
  %1705 = vmatpush.msra.mxu0 0.0
  %1706 = vmatpush.msra.mxu0 0.0
  %1707 = vmatpush.msra.mxu0 0.0
  %1708 = vmatpush.msra.mxu0 0.0
  %1709 = vmatpush.msra.mxu0 0.0
  %1710 = vmatpush.msra.mxu0 0.0
  %1711 = vmatpush.msra.mxu0 0.0
  %1712 = vmatpush.msra.mxu0 0.0
  %1713 = vmatpush.msra.mxu0 %v1621
  %1714 = vmatmul.f32.gmra.mxu0 %v1676
  %v1715 = vpop.f32.mrf.mxu0
  %v1716 = vadd.f32 %v1673, %v1715
  %1717 = vdwg.mxu0
  %1718 = vrot.lane.b32.xlu0 %v1612, 15
  %v1719 = vpop.permute.xlu0 %1718
  %1720 = vrot.lane.b32.xlu0 %v1613, 15
  %v1721 = vpop.permute.xlu0 %1720
  %v1722 = vsel %vm152, %v1719, %v1721
  %v1723 = vsel %vm152, %v1721, %v1719
  %v1724 = vmul.f32 %v1723, %v1206
  %v1725 = vmul.f32 %v1722, %v1207
  %v1726 = vld [vmem:[%s696] sm:$0xff]
  %v1728 = vsel %vm61, %v1726, 0
  %1730 = vmatpush.msra.mxu0 0.0
  %1731 = vmatpush.msra.mxu0 0.0
  %1732 = vmatpush.msra.mxu0 0.0
  %1733 = vmatpush.msra.mxu0 0.0
  %1734 = vmatpush.msra.mxu0 0.0
  %1735 = vmatpush.msra.mxu0 0.0
  %1736 = vmatpush.msra.mxu0 0.0
  %1737 = vmatpush.msra.mxu0 0.0
  %1738 = vmatpush.msra.mxu0 0.0
  %1739 = vmatpush.msra.mxu0 0.0
  %1740 = vmatpush.msra.mxu0 0.0
  %1741 = vmatpush.msra.mxu0 0.0
  %1742 = vmatpush.msra.mxu0 0.0
  %1743 = vmatpush.msra.mxu0 0.0
  %1744 = vmatpush.msra.mxu0 0.0
  %1745 = vmatpush.msra.mxu0 %v1724
  %1746 = vmatmul.f32.gmra.mxu0 %v1728
  %v1747 = vpop.f32.mrf.mxu0
  %v1748 = vadd.f32 0.0, %v1747
  %1749 = vdwg.mxu0
  %1750 = vmatpush.msra.mxu0 0.0
  %1751 = vmatpush.msra.mxu0 0.0
  %1752 = vmatpush.msra.mxu0 0.0
  %1753 = vmatpush.msra.mxu0 0.0
  %1754 = vmatpush.msra.mxu0 0.0
  %1755 = vmatpush.msra.mxu0 0.0
  %1756 = vmatpush.msra.mxu0 0.0
  %1757 = vmatpush.msra.mxu0 0.0
  %1758 = vmatpush.msra.mxu0 0.0
  %1759 = vmatpush.msra.mxu0 0.0
  %1760 = vmatpush.msra.mxu0 0.0
  %1761 = vmatpush.msra.mxu0 0.0
  %1762 = vmatpush.msra.mxu0 0.0
  %1763 = vmatpush.msra.mxu0 0.0
  %1764 = vmatpush.msra.mxu0 0.0
  %1765 = vmatpush.msra.mxu0 %v1725
  %1766 = vmatmul.f32.gmra.mxu0 %v1728
  %v1767 = vpop.f32.mrf.mxu0
  %v1768 = vadd.f32 0.0, %v1767
  %1769 = vdwg.mxu0
  %v1770 = vadd.f32 %v1696, %v1748
  %v1771 = vadd.f32 %v1716, %v1768
  %1772 = vrot.lane.b32.xlu0 %v1612, 1
  %v1773 = vpop.permute.xlu0 %1772
  %1774 = vrot.lane.b32.xlu0 %v1613, 1
  %v1775 = vpop.permute.xlu0 %1774
  %v1776 = vsel %vm215, %v1773, %v1775
  %v1777 = vsel %vm215, %v1775, %v1773
  %v1778 = vmul.f32 %v1777, %v1266
  %v1779 = vmul.f32 %v1776, %v1267
  %v1780 = vld [vmem:[%s751] sm:$0xff]
  %v1782 = vsel %vm61, %v1780, 0
  %1784 = vmatpush.msra.mxu0 0.0
  %1785 = vmatpush.msra.mxu0 0.0
  %1786 = vmatpush.msra.mxu0 0.0
  %1787 = vmatpush.msra.mxu0 0.0
  %1788 = vmatpush.msra.mxu0 0.0
  %1789 = vmatpush.msra.mxu0 0.0
  %1790 = vmatpush.msra.mxu0 0.0
  %1791 = vmatpush.msra.mxu0 0.0
  %1792 = vmatpush.msra.mxu0 0.0
  %1793 = vmatpush.msra.mxu0 0.0
  %1794 = vmatpush.msra.mxu0 0.0
  %1795 = vmatpush.msra.mxu0 0.0
  %1796 = vmatpush.msra.mxu0 0.0
  %1797 = vmatpush.msra.mxu0 0.0
  %1798 = vmatpush.msra.mxu0 0.0
  %1799 = vmatpush.msra.mxu0 %v1778
  %1800 = vmatmul.f32.gmra.mxu0 %v1782
  %v1801 = vpop.f32.mrf.mxu0
  %v1802 = vadd.f32 0.0, %v1801
  %1803 = vdwg.mxu0
  %1804 = vmatpush.msra.mxu0 0.0
  %1805 = vmatpush.msra.mxu0 0.0
  %1806 = vmatpush.msra.mxu0 0.0
  %1807 = vmatpush.msra.mxu0 0.0
  %1808 = vmatpush.msra.mxu0 0.0
  %1809 = vmatpush.msra.mxu0 0.0
  %1810 = vmatpush.msra.mxu0 0.0
  %1811 = vmatpush.msra.mxu0 0.0
  %1812 = vmatpush.msra.mxu0 0.0
  %1813 = vmatpush.msra.mxu0 0.0
  %1814 = vmatpush.msra.mxu0 0.0
  %1815 = vmatpush.msra.mxu0 0.0
  %1816 = vmatpush.msra.mxu0 0.0
  %1817 = vmatpush.msra.mxu0 0.0
  %1818 = vmatpush.msra.mxu0 0.0
  %1819 = vmatpush.msra.mxu0 %v1779
  %1820 = vmatmul.f32.gmra.mxu0 %v1782
  %v1821 = vpop.f32.mrf.mxu0
  %v1822 = vadd.f32 0.0, %v1821
  %1823 = vdwg.mxu0
  %v1824 = vadd.f32 %v1770, %v1802
  %v1825 = vadd.f32 %v1771, %v1822
  %v1826 = vld [vmem:[%s798] sm:$0xff]
  %v1828 = vsel %vm61, %v1826, 0
  %1830 = vmatpush.msra.mxu0 0.0
  %1831 = vmatpush.msra.mxu0 0.0
  %1832 = vmatpush.msra.mxu0 0.0
  %1833 = vmatpush.msra.mxu0 0.0
  %1834 = vmatpush.msra.mxu0 0.0
  %1835 = vmatpush.msra.mxu0 0.0
  %1836 = vmatpush.msra.mxu0 0.0
  %1837 = vmatpush.msra.mxu0 0.0
  %1838 = vmatpush.msra.mxu0 0.0
  %1839 = vmatpush.msra.mxu0 0.0
  %1840 = vmatpush.msra.mxu0 0.0
  %1841 = vmatpush.msra.mxu0 0.0
  %1842 = vmatpush.msra.mxu0 0.0
  %1843 = vmatpush.msra.mxu0 0.0
  %1844 = vmatpush.msra.mxu0 0.0
  %1845 = vmatpush.msra.mxu0 %v1612
  %1846 = vmatmul.f32.gmra.mxu0 %v1828
  %v1847 = vpop.f32.mrf.mxu0
  %v1848 = vadd.f32 0.0, %v1847
  %1849 = vdwg.mxu0
  %1850 = vmatpush.msra.mxu0 0.0
  %1851 = vmatpush.msra.mxu0 0.0
  %1852 = vmatpush.msra.mxu0 0.0
  %1853 = vmatpush.msra.mxu0 0.0
  %1854 = vmatpush.msra.mxu0 0.0
  %1855 = vmatpush.msra.mxu0 0.0
  %1856 = vmatpush.msra.mxu0 0.0
  %1857 = vmatpush.msra.mxu0 0.0
  %1858 = vmatpush.msra.mxu0 0.0
  %1859 = vmatpush.msra.mxu0 0.0
  %1860 = vmatpush.msra.mxu0 0.0
  %1861 = vmatpush.msra.mxu0 0.0
  %1862 = vmatpush.msra.mxu0 0.0
  %1863 = vmatpush.msra.mxu0 0.0
  %1864 = vmatpush.msra.mxu0 0.0
  %1865 = vmatpush.msra.mxu0 %v1613
  %1866 = vmatmul.f32.gmra.mxu0 %v1828
  %v1867 = vpop.f32.mrf.mxu0
  %v1868 = vadd.f32 0.0, %v1867
  %1869 = vdwg.mxu0
  %v1870 = vadd.f32 %v1824, %v1848
  %v1871 = vadd.f32 %v1825, %v1868
  %1872 = vrot.lane.b32.xlu0 %v1612, 127
  %v1873 = vpop.permute.xlu0 %1872
  %1874 = vrot.lane.b32.xlu0 %v1613, 127
  %v1875 = vpop.permute.xlu0 %1874
  %v1876 = vsel %vm325, %v1873, %v1875
  %v1877 = vsel %vm325, %v1875, %v1873
  %v1878 = vmul.f32 %v1876, %v1372
  %v1879 = vmul.f32 %v1877, %v1373
  %v1880 = vld [vmem:[%s853] sm:$0xff]
  %v1882 = vsel %vm61, %v1880, 0
  %1884 = vmatpush.msra.mxu0 0.0
  %1885 = vmatpush.msra.mxu0 0.0
  %1886 = vmatpush.msra.mxu0 0.0
  %1887 = vmatpush.msra.mxu0 0.0
  %1888 = vmatpush.msra.mxu0 0.0
  %1889 = vmatpush.msra.mxu0 0.0
  %1890 = vmatpush.msra.mxu0 0.0
  %1891 = vmatpush.msra.mxu0 0.0
  %1892 = vmatpush.msra.mxu0 0.0
  %1893 = vmatpush.msra.mxu0 0.0
  %1894 = vmatpush.msra.mxu0 0.0
  %1895 = vmatpush.msra.mxu0 0.0
  %1896 = vmatpush.msra.mxu0 0.0
  %1897 = vmatpush.msra.mxu0 0.0
  %1898 = vmatpush.msra.mxu0 0.0
  %1899 = vmatpush.msra.mxu0 %v1878
  %1900 = vmatmul.f32.gmra.mxu0 %v1882
  %v1901 = vpop.f32.mrf.mxu0
  %v1902 = vadd.f32 0.0, %v1901
  %1903 = vdwg.mxu0
  %1904 = vmatpush.msra.mxu0 0.0
  %1905 = vmatpush.msra.mxu0 0.0
  %1906 = vmatpush.msra.mxu0 0.0
  %1907 = vmatpush.msra.mxu0 0.0
  %1908 = vmatpush.msra.mxu0 0.0
  %1909 = vmatpush.msra.mxu0 0.0
  %1910 = vmatpush.msra.mxu0 0.0
  %1911 = vmatpush.msra.mxu0 0.0
  %1912 = vmatpush.msra.mxu0 0.0
  %1913 = vmatpush.msra.mxu0 0.0
  %1914 = vmatpush.msra.mxu0 0.0
  %1915 = vmatpush.msra.mxu0 0.0
  %1916 = vmatpush.msra.mxu0 0.0
  %1917 = vmatpush.msra.mxu0 0.0
  %1918 = vmatpush.msra.mxu0 0.0
  %1919 = vmatpush.msra.mxu0 %v1879
  %1920 = vmatmul.f32.gmra.mxu0 %v1882
  %v1921 = vpop.f32.mrf.mxu0
  %v1922 = vadd.f32 0.0, %v1921
  %1923 = vdwg.mxu0
  %v1924 = vadd.f32 %v1870, %v1902
  %v1925 = vadd.f32 %v1871, %v1922
  %1926 = vrot.lane.b32.xlu0 %v1612, 113
  %v1927 = vpop.permute.xlu0 %1926
  %1928 = vrot.lane.b32.xlu0 %v1613, 113
  %v1929 = vpop.permute.xlu0 %1928
  %v1930 = vsel %vm388, %v1927, %v1929
  %v1931 = vsel %vm388, %v1929, %v1927
  %v1932 = vmul.f32 %v1930, %v1432
  %v1933 = vmul.f32 %v1931, %v1433
  %v1934 = vld [vmem:[%s908] sm:$0xff]
  %v1936 = vsel %vm61, %v1934, 0
  %1938 = vmatpush.msra.mxu0 0.0
  %1939 = vmatpush.msra.mxu0 0.0
  %1940 = vmatpush.msra.mxu0 0.0
  %1941 = vmatpush.msra.mxu0 0.0
  %1942 = vmatpush.msra.mxu0 0.0
  %1943 = vmatpush.msra.mxu0 0.0
  %1944 = vmatpush.msra.mxu0 0.0
  %1945 = vmatpush.msra.mxu0 0.0
  %1946 = vmatpush.msra.mxu0 0.0
  %1947 = vmatpush.msra.mxu0 0.0
  %1948 = vmatpush.msra.mxu0 0.0
  %1949 = vmatpush.msra.mxu0 0.0
  %1950 = vmatpush.msra.mxu0 0.0
  %1951 = vmatpush.msra.mxu0 0.0
  %1952 = vmatpush.msra.mxu0 0.0
  %1953 = vmatpush.msra.mxu0 %v1932
  %1954 = vmatmul.f32.gmra.mxu0 %v1936
  %v1955 = vpop.f32.mrf.mxu0
  %v1956 = vadd.f32 0.0, %v1955
  %1957 = vdwg.mxu0
  %1958 = vmatpush.msra.mxu0 0.0
  %1959 = vmatpush.msra.mxu0 0.0
  %1960 = vmatpush.msra.mxu0 0.0
  %1961 = vmatpush.msra.mxu0 0.0
  %1962 = vmatpush.msra.mxu0 0.0
  %1963 = vmatpush.msra.mxu0 0.0
  %1964 = vmatpush.msra.mxu0 0.0
  %1965 = vmatpush.msra.mxu0 0.0
  %1966 = vmatpush.msra.mxu0 0.0
  %1967 = vmatpush.msra.mxu0 0.0
  %1968 = vmatpush.msra.mxu0 0.0
  %1969 = vmatpush.msra.mxu0 0.0
  %1970 = vmatpush.msra.mxu0 0.0
  %1971 = vmatpush.msra.mxu0 0.0
  %1972 = vmatpush.msra.mxu0 0.0
  %1973 = vmatpush.msra.mxu0 %v1933
  %1974 = vmatmul.f32.gmra.mxu0 %v1936
  %v1975 = vpop.f32.mrf.mxu0
  %v1976 = vadd.f32 0.0, %v1975
  %1977 = vdwg.mxu0
  %v1978 = vadd.f32 %v1924, %v1956
  %v1979 = vadd.f32 %v1925, %v1976
  %1980 = vrot.lane.b32.xlu0 %v1612, 112
  %v1981 = vpop.permute.xlu0 %1980
  %1982 = vrot.lane.b32.xlu0 %v1613, 112
  %v1983 = vpop.permute.xlu0 %1982
  %v1984 = vsel %vm451, %v1981, %v1983
  %v1985 = vsel %vm451, %v1983, %v1981
  %v1986 = vmul.f32 %v1984, %v1492
  %v1987 = vmul.f32 %v1985, %v1493
  %v1988 = vld [vmem:[%s963] sm:$0xff]
  %v1990 = vsel %vm61, %v1988, 0
  %1992 = vmatpush.msra.mxu0 0.0
  %1993 = vmatpush.msra.mxu0 0.0
  %1994 = vmatpush.msra.mxu0 0.0
  %1995 = vmatpush.msra.mxu0 0.0
  %1996 = vmatpush.msra.mxu0 0.0
  %1997 = vmatpush.msra.mxu0 0.0
  %1998 = vmatpush.msra.mxu0 0.0
  %1999 = vmatpush.msra.mxu0 0.0
  %2000 = vmatpush.msra.mxu0 0.0
  %2001 = vmatpush.msra.mxu0 0.0
  %2002 = vmatpush.msra.mxu0 0.0
  %2003 = vmatpush.msra.mxu0 0.0
  %2004 = vmatpush.msra.mxu0 0.0
  %2005 = vmatpush.msra.mxu0 0.0
  %2006 = vmatpush.msra.mxu0 0.0
  %2007 = vmatpush.msra.mxu0 %v1986
  %2008 = vmatmul.f32.gmra.mxu0 %v1990
  %v2009 = vpop.f32.mrf.mxu0
  %v2010 = vadd.f32 0.0, %v2009
  %2011 = vdwg.mxu0
  %2012 = vmatpush.msra.mxu0 0.0
  %2013 = vmatpush.msra.mxu0 0.0
  %2014 = vmatpush.msra.mxu0 0.0
  %2015 = vmatpush.msra.mxu0 0.0
  %2016 = vmatpush.msra.mxu0 0.0
  %2017 = vmatpush.msra.mxu0 0.0
  %2018 = vmatpush.msra.mxu0 0.0
  %2019 = vmatpush.msra.mxu0 0.0
  %2020 = vmatpush.msra.mxu0 0.0
  %2021 = vmatpush.msra.mxu0 0.0
  %2022 = vmatpush.msra.mxu0 0.0
  %2023 = vmatpush.msra.mxu0 0.0
  %2024 = vmatpush.msra.mxu0 0.0
  %2025 = vmatpush.msra.mxu0 0.0
  %2026 = vmatpush.msra.mxu0 0.0
  %2027 = vmatpush.msra.mxu0 %v1987
  %2028 = vmatmul.f32.gmra.mxu0 %v1990
  %v2029 = vpop.f32.mrf.mxu0
  %v2030 = vadd.f32 0.0, %v2029
  %2031 = vdwg.mxu0
  %v2032 = vadd.f32 %v1978, %v2010
  %v2033 = vadd.f32 %v1979, %v2030
  %2034 = vrot.lane.b32.xlu0 %v1612, 111
  %v2035 = vpop.permute.xlu0 %2034
  %2036 = vrot.lane.b32.xlu0 %v1613, 111
  %v2037 = vpop.permute.xlu0 %2036
  %v2038 = vsel %vm514, %v2035, %v2037
  %v2039 = vsel %vm514, %v2037, %v2035
  %v2040 = vmul.f32 %v2038, %v1552
  %v2041 = vmul.f32 %v2039, %v1553
  %v2042 = vld [vmem:[%s1018] sm:$0xff]
  %v2044 = vsel %vm61, %v2042, 0
  %2046 = vmatpush.msra.mxu0 0.0
  %2047 = vmatpush.msra.mxu0 0.0
  %2048 = vmatpush.msra.mxu0 0.0
  %2049 = vmatpush.msra.mxu0 0.0
  %2050 = vmatpush.msra.mxu0 0.0
  %2051 = vmatpush.msra.mxu0 0.0
  %2052 = vmatpush.msra.mxu0 0.0
  %2053 = vmatpush.msra.mxu0 0.0
  %2054 = vmatpush.msra.mxu0 0.0
  %2055 = vmatpush.msra.mxu0 0.0
  %2056 = vmatpush.msra.mxu0 0.0
  %2057 = vmatpush.msra.mxu0 0.0
  %2058 = vmatpush.msra.mxu0 0.0
  %2059 = vmatpush.msra.mxu0 0.0
  %2060 = vmatpush.msra.mxu0 0.0
  %2061 = vmatpush.msra.mxu0 %v2040
  %2062 = vmatmul.f32.gmra.mxu0 %v2044
  %v2063 = vpop.f32.mrf.mxu0
  %v2064 = vadd.f32 0.0, %v2063
  %2065 = vdwg.mxu0
  %2066 = vmatpush.msra.mxu0 0.0
  %2067 = vmatpush.msra.mxu0 0.0
  %2068 = vmatpush.msra.mxu0 0.0
  %2069 = vmatpush.msra.mxu0 0.0
  %2070 = vmatpush.msra.mxu0 0.0
  %2071 = vmatpush.msra.mxu0 0.0
  %2072 = vmatpush.msra.mxu0 0.0
  %2073 = vmatpush.msra.mxu0 0.0
  %2074 = vmatpush.msra.mxu0 0.0
  %2075 = vmatpush.msra.mxu0 0.0
  %2076 = vmatpush.msra.mxu0 0.0
  %2077 = vmatpush.msra.mxu0 0.0
  %2078 = vmatpush.msra.mxu0 0.0
  %2079 = vmatpush.msra.mxu0 0.0
  %2080 = vmatpush.msra.mxu0 0.0
  %2081 = vmatpush.msra.mxu0 %v2041
  %2082 = vmatmul.f32.gmra.mxu0 %v2044
  %v2083 = vpop.f32.mrf.mxu0
  %v2084 = vadd.f32 0.0, %v2083
  %2085 = vdwg.mxu0
  %v2086 = vadd.f32 %v2032, %v2064
  %v2087 = vadd.f32 %v2033, %v2084
  %v2088 = vld [vmem:[%s4] sm:$0xff]
  %2090 = vset.pattern.permute.xlu0 0
  %2091 = vperm.xlu0 %2090, %v2088
  %v2092 = vpop.permute.xlu0 %2091
  %v2094 = vadd.f32 %v2086, %v2092
  %v2095 = vadd.f32 %v2087, %v2092
  %v2096 = vadd.f32 %v2094, %v1080
  %v2097 = vadd.f32 %v2095, %v1081
  %v2098 = vmax.f32 %v2096, 0.0
  %v2099 = vmax.f32 %v2097, 0.0
  %s2100 = scalar_lea.vmem %s6, 16
  %2101 = vst [vmem:[%s2100] sm:$0xff] %v2098
  %2102 = vst [vmem:[%s2100 + $0x8] sm:$0xff] %v2099
  // Predicated region
  $region26: #{basic_block_2d_forward.1} parent=0 // pred_check
    _
  $region27: #{basic_block_2d_forward.1} parent=0 // pred_check_branch
    %2104 = sbr.rel (0) target = $region29
  $region28: #{basic_block_2d_forward.1} parent=0 // pred_region
    _
  $region29: #{basic_block_2d_forward.1} parent=0 // pred_fallthru
    _
  // Predicated region
  $region30: #{basic_block_2d_forward.1} parent=0 // pred_check
    _
  $region31: #{basic_block_2d_forward.1} parent=0 // pred_check_branch
    %2106 = sbr.rel (0) target = $region33
  $region32: #{basic_block_2d_forward.1} parent=0 // pred_region
    _
  $region33: #{basic_block_2d_forward.1} parent=0 // pred_fallthru
    _

</llo_original>
